<compile_context>
chip_gen: v7x
topology: tpu7x:2x2x1
jax: 0.10.0
libtpu: 0.0.40
codegen_flags: <defaults>
</compile_context>

<pallas_src>
import jax
import jax.numpy as jnp
from jax import lax
from jax.experimental import pallas as pl
from jax.experimental.pallas import tpu as pltpu

# ---- synthetic "tiny BERT" config (stand-in for bert-base-uncased) ----------
B, S, H, NH, FF, V = 2, 8, 32, 4, 64, 128
HD = H // NH
TOT = B * S
EPS = 1e-12
# tokenizer.convert_tokens_to_ids('news') / ('rumor') replaced by fixed ids:
REAL_ID, FAKE_ID = 5, 7

# Row indices inside the packed (11, H) vector table.
(_LN_E_G, _LN_E_B, _BO, _LN1_G, _LN1_B, _B2,
 _LN2_G, _LN2_B, _BT, _LN3_G, _LN3_B) = range(11)


def _layernorm(x, g, b):
    m = jnp.mean(x, axis=-1, keepdims=True)
    v = jnp.mean((x - m) ** 2, axis=-1, keepdims=True)
    return (x - m) * lax.rsqrt(v + EPS) * g + b


def _softmax(x):
    x = x - jnp.max(x, axis=-1, keepdims=True)
    e = jnp.exp(x)
    return e / jnp.sum(e, axis=-1, keepdims=True)


def bert_prompt_kernel(mp_ref, x_ref, wqkv_ref, bqkv_ref, wo_ref, w1_ref, b1_ref,
                       w2_ref, wt_ref, wdec_ref, bdec_ref, vec_ref, bias_ref,
                       out_ref, ctx_ref):
    vecs = vec_ref[...]                                    # (11, H) f32
    ln_e_g, ln_e_b = vecs[_LN_E_G:_LN_E_G + 1], vecs[_LN_E_B:_LN_E_B + 1]
    bo = vecs[_BO:_BO + 1]
    ln1_g, ln1_b = vecs[_LN1_G:_LN1_G + 1], vecs[_LN1_B:_LN1_B + 1]
    b2 = vecs[_B2:_B2 + 1]
    ln2_g, ln2_b = vecs[_LN2_G:_LN2_G + 1], vecs[_LN2_B:_LN2_B + 1]
    bt = vecs[_BT:_BT + 1]
    ln3_g, ln3_b = vecs[_LN3_G:_LN3_G + 1], vecs[_LN3_B:_LN3_B + 1]

    x = x_ref[...]                                         # (TOT, H) f32 embeddings
    x = _layernorm(x, ln_e_g, ln_e_b)                      # embedding LayerNorm

    # ---- self-attention: fused QKV projection (scale folded into wq/bq) ----
    qkv = jnp.dot(x.astype(jnp.bfloat16), wqkv_ref[...],
                  preferred_element_type=jnp.float32) + bqkv_ref[...]   # (TOT, 3H)
    attn_bias = bias_ref[...]                              # (TOT, TOT) block-diagonal

    for h in range(NH):                                    # NH static -> unrolled
        qs = qkv[:, h * HD:(h + 1) * HD].astype(jnp.bfloat16)
        ks = qkv[:, H + h * HD:H + (h + 1) * HD].astype(jnp.bfloat16)
        vs = qkv[:, 2 * H + h * HD:2 * H + (h + 1) * HD].astype(jnp.bfloat16)
        s = jnp.dot(qs, ks.T, preferred_element_type=jnp.float32) + attn_bias
        a = _softmax(s)                                    # (TOT, TOT)
        # write each head's context straight into the scratch slab (no concat)
        ctx_ref[:, h * HD:(h + 1) * HD] = jnp.dot(
            a.astype(jnp.bfloat16), vs, preferred_element_type=jnp.float32)
    ctx = ctx_ref[...]                                     # (TOT, H)

    attn_out = jnp.dot(ctx.astype(jnp.bfloat16), wo_ref[...],
                       preferred_element_type=jnp.float32) + bo
    x = _layernorm(x + attn_out, ln1_g, ln1_b)

    # ---- feed-forward ----
    # TODO(synk): HF BERT uses exact (erf) GELU; tanh approximation used here.
    h1 = jax.nn.gelu(jnp.dot(x.astype(jnp.bfloat16), w1_ref[...],
                             preferred_element_type=jnp.float32) + b1_ref[...],
                     approximate=True)
    ff = jnp.dot(h1.astype(jnp.bfloat16), w2_ref[...],
                 preferred_element_type=jnp.float32) + b2
    x = _layernorm(x + ff, ln2_g, ln2_b)                   # last hidden state (TOT, H)
    # TODO(synk): real bert-base has 12 encoder layers; one layer stands in here.

    # ---- select masked row of each batch element via a one-hot matmul gather ----
    mp = mp_ref[0]
    tok = lax.broadcasted_iota(jnp.int32, (B, TOT), 1)
    bat = lax.broadcasted_iota(jnp.int32, (B, TOT), 0)
    sel = jnp.where(tok == bat * S + mp, 1.0, 0.0).astype(jnp.bfloat16)   # (B, TOT)
    hm = jnp.dot(sel, x.astype(jnp.bfloat16), preferred_element_type=jnp.float32)

    # ---- MLM head, softmax over vocab (lane-dense (B, V) output) ----
    hm = jax.nn.gelu(jnp.dot(hm.astype(jnp.bfloat16), wt_ref[...],
                             preferred_element_type=jnp.float32) + bt,
                     approximate=True)
    hm = _layernorm(hm, ln3_g, ln3_b)
    logits = jnp.dot(hm.astype(jnp.bfloat16), wdec_ref[...],
                     preferred_element_type=jnp.float32) + bdec_ref[...]   # (B, V)
    out_ref[...] = _softmax(logits)


def bert_prompt_forward(input_ids, masked_position, params):
    """input_ids: (B, 1, S) int32, masked_position: python/int scalar."""
    ids = input_ids[:, 0, :]                               # .squeeze(1) -> (B, S)

    # Embedding lookup (gather) stays in plain JAX glue.
    x = (params["word_emb"][ids]
         + params["pos_emb"][None, :, :]
         + params["type_emb"][0][None, None, :]).astype(jnp.float32)      # (B, S, H)
    x = x.reshape(TOT, H)                                  # single flattened slab

    mp = jnp.asarray([masked_position], dtype=jnp.int32)

    probs = pl.pallas_call(
        bert_prompt_kernel,
        out_shape=jax.ShapeDtypeStruct((B, V), jnp.float32),
        in_specs=[pl.BlockSpec(memory_space=pltpu.MemorySpace.SMEM)]
                 + [pl.BlockSpec(memory_space=pltpu.MemorySpace.VMEM)] * 12,
        out_specs=pl.BlockSpec(memory_space=pltpu.MemorySpace.VMEM),
        scratch_shapes=[pltpu.VMEM((TOT, H), jnp.float32)],   # per-head ctx slab
    )(mp, x,
      params["wqkv"], params["bqkv"], params["wo"],
      params["w1"], params["b1"], params["w2"],
      params["wt"], params["wdec"], params["bdec"],
      params["vecs"], params["attn_bias"])

    # tiny 2-id gather outside the kernel keeps the kernel output lane-dense
    return probs[:, jnp.array([REAL_ID, FAKE_ID], dtype=jnp.int32)]       # (B, 2)


def init_params(key):
    ks = iter(jax.random.split(key, 16))

    def dense(shape):
        return (0.02 * jax.random.normal(next(ks), shape)).astype(jnp.float32)

    def ones(shape):
        return jnp.ones(shape, jnp.float32)

    def zeros(shape):
        return jnp.zeros(shape, jnp.float32)

    # --- fused q/k/v projection, with the 1/sqrt(HD) score scale folded in ---
    scale = 1.0 / (HD ** 0.5)
    wq, wk, wv = dense((H, H)), dense((H, H)), dense((H, H))
    bq, bk, bv = zeros((1, H)), zeros((1, H)), zeros((1, H))
    wqkv = jnp.concatenate([wq * scale, wk, wv], axis=1).astype(jnp.bfloat16)  # (H, 3H)
    bqkv = jnp.concatenate([bq * scale, bk, bv], axis=1)                       # (1, 3H)

    # --- all (1, H) LayerNorm / bias vectors stacked into one table ---
    vecs = jnp.concatenate([
        ones((1, H)), zeros((1, H)),     # ln_e_g, ln_e_b
        zeros((1, H)),                   # bo
        ones((1, H)), zeros((1, H)),     # ln1_g, ln1_b
        zeros((1, H)),                   # b2
        ones((1, H)), zeros((1, H)),     # ln2_g, ln2_b
        zeros((1, H)),                   # bt
        ones((1, H)), zeros((1, H)),     # ln3_g, ln3_b
    ], axis=0)                           # (11, H)

    # --- block-diagonal additive attention bias for the flattened (B*S) slab ---
    seq_id = jnp.arange(TOT, dtype=jnp.int32) // S
    attn_bias = jnp.where(seq_id[:, None] == seq_id[None, :], 0.0, -1e30
                          ).astype(jnp.float32)            # (TOT, TOT)

    return {
        "word_emb": dense((V, H)), "pos_emb": dense((S, H)), "type_emb": dense((2, H)),
        "wqkv": wqkv, "bqkv": bqkv,
        "wo": dense((H, H)).astype(jnp.bfloat16),
        "w1": dense((H, FF)).astype(jnp.bfloat16), "b1": zeros((1, FF)),
        "w2": dense((FF, H)).astype(jnp.bfloat16),
        "wt": dense((H, H)).astype(jnp.bfloat16),
        "wdec": dense((H, V)).astype(jnp.bfloat16), "bdec": zeros((1, V)),
        "vecs": vecs, "attn_bias": attn_bias,
    }


if __name__ == "__main__":
    key = jax.random.PRNGKey(0)
    pkey, dkey = jax.random.split(key)
    params = init_params(pkey)

    input_ids = jax.random.randint(dkey, (B, 1, S), 0, V, dtype=jnp.int32)
    masked_position = 3

    probs = bert_prompt_forward(input_ids, masked_position, params)
    jax.block_until_ready(probs)
    assert probs.shape == (B, 2)
    print("KERNEL_OK")
</pallas_src>

<mosaic_0001>
module attributes {stable_mosaic.version = 11 : i64} {
  func.func @bert_prompt_kernel(%arg0: memref<1xi32, #tpu.memory_space<smem>>, %arg1: memref<16x32xf32, #tpu.memory_space<vmem>>, %arg2: memref<32x96xbf16, #tpu.memory_space<vmem>>, %arg3: memref<1x96xf32, #tpu.memory_space<vmem>>, %arg4: memref<32x32xbf16, #tpu.memory_space<vmem>>, %arg5: memref<32x64xbf16, #tpu.memory_space<vmem>>, %arg6: memref<1x64xf32, #tpu.memory_space<vmem>>, %arg7: memref<64x32xbf16, #tpu.memory_space<vmem>>, %arg8: memref<32x32xbf16, #tpu.memory_space<vmem>>, %arg9: memref<32x128xbf16, #tpu.memory_space<vmem>>, %arg10: memref<1x128xf32, #tpu.memory_space<vmem>>, %arg11: memref<11x32xf32, #tpu.memory_space<vmem>>, %arg12: memref<16x16xf32, #tpu.memory_space<vmem>>, %arg13: memref<2x128xf32, #tpu.memory_space<vmem>>, %arg14: memref<16x32xf32, #tpu.memory_space<vmem>>) attributes {dimension_semantics = [], scalar_prefetch = 0 : i64, scratch_operands = 1 : i64, tpu.core_type = #tpu.core_type<tc>} {
    %c0 = arith.constant 0 : index
    %c0_0 = arith.constant 0 : index
    %0 = vector.load %arg11[%c0, %c0_0] : memref<11x32xf32, #tpu.memory_space<vmem>>, vector<11x32xf32>
    %1 = vector.extract_strided_slice %0 {offsets = [0, 0], sizes = [1, 32], strides = [1, 1]} : vector<11x32xf32> to vector<1x32xf32>
    %2 = vector.extract_strided_slice %0 {offsets = [1, 0], sizes = [1, 32], strides = [1, 1]} : vector<11x32xf32> to vector<1x32xf32>
    %3 = vector.extract_strided_slice %0 {offsets = [2, 0], sizes = [1, 32], strides = [1, 1]} : vector<11x32xf32> to vector<1x32xf32>
    %4 = vector.extract_strided_slice %0 {offsets = [3, 0], sizes = [1, 32], strides = [1, 1]} : vector<11x32xf32> to vector<1x32xf32>
    %5 = vector.extract_strided_slice %0 {offsets = [4, 0], sizes = [1, 32], strides = [1, 1]} : vector<11x32xf32> to vector<1x32xf32>
    %6 = vector.extract_strided_slice %0 {offsets = [5, 0], sizes = [1, 32], strides = [1, 1]} : vector<11x32xf32> to vector<1x32xf32>
    %7 = vector.extract_strided_slice %0 {offsets = [6, 0], sizes = [1, 32], strides = [1, 1]} : vector<11x32xf32> to vector<1x32xf32>
    %8 = vector.extract_strided_slice %0 {offsets = [7, 0], sizes = [1, 32], strides = [1, 1]} : vector<11x32xf32> to vector<1x32xf32>
    %9 = vector.extract_strided_slice %0 {offsets = [8, 0], sizes = [1, 32], strides = [1, 1]} : vector<11x32xf32> to vector<1x32xf32>
    %10 = vector.extract_strided_slice %0 {offsets = [9, 0], sizes = [1, 32], strides = [1, 1]} : vector<11x32xf32> to vector<1x32xf32>
    %11 = vector.extract_strided_slice %0 {offsets = [10, 0], sizes = [1, 32], strides = [1, 1]} : vector<11x32xf32> to vector<1x32xf32>
    %c0_1 = arith.constant 0 : index
    %c0_2 = arith.constant 0 : index
    %12 = vector.load %arg1[%c0_1, %c0_2] : memref<16x32xf32, #tpu.memory_space<vmem>>, vector<16x32xf32>
    %cst = arith.constant dense<0.000000e+00> : vector<16xf32>
    %13 = vector.multi_reduction <add>, %12, %cst [1] : vector<16x32xf32> to vector<16xf32>
    %14 = vector.shape_cast %13 : vector<16xf32> to vector<16x1xf32>
    %cst_3 = arith.constant 3.200000e+01 : f32
    %15 = vector.broadcast %cst_3 : f32 to vector<16x1xf32>
    %16 = arith.divf %14, %15 : vector<16x1xf32>
    %17 = vector.broadcast %16 : vector<16x1xf32> to vector<16x32xf32>
    %18 = arith.subf %12, %17 : vector<16x32xf32>
    %19 = arith.mulf %18, %18 : vector<16x32xf32>
    %cst_4 = arith.constant dense<0.000000e+00> : vector<16xf32>
    %20 = vector.multi_reduction <add>, %19, %cst_4 [1] : vector<16x32xf32> to vector<16xf32>
    %21 = vector.shape_cast %20 : vector<16xf32> to vector<16x1xf32>
    %cst_5 = arith.constant 3.200000e+01 : f32
    %22 = vector.broadcast %cst_5 : f32 to vector<16x1xf32>
    %23 = arith.divf %21, %22 : vector<16x1xf32>
    %24 = vector.broadcast %16 : vector<16x1xf32> to vector<16x32xf32>
    %25 = arith.subf %12, %24 : vector<16x32xf32>
    %cst_6 = arith.constant 9.99999996E-13 : f32
    %26 = vector.broadcast %cst_6 : f32 to vector<16x1xf32>
    %27 = arith.addf %23, %26 : vector<16x1xf32>
    %28 = math.rsqrt %27 : vector<16x1xf32>
    %29 = vector.broadcast %28 : vector<16x1xf32> to vector<16x32xf32>
    %30 = arith.mulf %25, %29 : vector<16x32xf32>
    %31 = vector.broadcast %1 : vector<1x32xf32> to vector<16x32xf32>
    %32 = arith.mulf %30, %31 : vector<16x32xf32>
    %33 = vector.broadcast %2 : vector<1x32xf32> to vector<16x32xf32>
    %34 = arith.addf %32, %33 : vector<16x32xf32>
    %35 = arith.truncf %34 : vector<16x32xf32> to vector<16x32xbf16>
    %c0_7 = arith.constant 0 : index
    %c0_8 = arith.constant 0 : index
    %36 = vector.load %arg2[%c0_7, %c0_8] : memref<32x96xbf16, #tpu.memory_space<vmem>>, vector<32x96xbf16>
    %cst_9 = arith.constant dense<0.000000e+00> : vector<16x96xf32>
    %37 = tpu.matmul %35, %36, %cst_9 {dimension_numbers = #tpu.dot_dimension_numbers<[1], [0], [0], [1], [0, 0, 1, 1], [], []>} : vector<16x32xbf16>, vector<32x96xbf16>, vector<16x96xf32> -> vector<16x96xf32>
    %c0_10 = arith.constant 0 : index
    %c0_11 = arith.constant 0 : index
    %38 = vector.load %arg3[%c0_10, %c0_11] : memref<1x96xf32, #tpu.memory_space<vmem>>, vector<1x96xf32>
    %39 = vector.broadcast %38 : vector<1x96xf32> to vector<16x96xf32>
    %40 = arith.addf %37, %39 : vector<16x96xf32>
    %c0_12 = arith.constant 0 : index
    %c0_13 = arith.constant 0 : index
    %41 = vector.load %arg12[%c0_12, %c0_13] : memref<16x16xf32, #tpu.memory_space<vmem>>, vector<16x16xf32>
    %42 = vector.extract_strided_slice %40 {offsets = [0, 0], sizes = [16, 8], strides = [1, 1]} : vector<16x96xf32> to vector<16x8xf32>
    %43 = arith.truncf %42 : vector<16x8xf32> to vector<16x8xbf16>
    %44 = vector.extract_strided_slice %40 {offsets = [0, 32], sizes = [16, 8], strides = [1, 1]} : vector<16x96xf32> to vector<16x8xf32>
    %45 = arith.truncf %44 : vector<16x8xf32> to vector<16x8xbf16>
    %46 = vector.extract_strided_slice %40 {offsets = [0, 64], sizes = [16, 8], strides = [1, 1]} : vector<16x96xf32> to vector<16x8xf32>
    %47 = arith.truncf %46 : vector<16x8xf32> to vector<16x8xbf16>
    %48 = tpu.transpose %45, [1, 0] : vector<16x8xbf16> -> vector<8x16xbf16>
    %cst_14 = arith.constant dense<0.000000e+00> : vector<16x16xf32>
    %49 = tpu.matmul %43, %48, %cst_14 {dimension_numbers = #tpu.dot_dimension_numbers<[1], [0], [0], [1], [0, 0, 1, 1], [], []>} : vector<16x8xbf16>, vector<8x16xbf16>, vector<16x16xf32> -> vector<16x16xf32>
    %50 = arith.addf %49, %41 : vector<16x16xf32>
    %cst_15 = arith.constant dense<0xFF800000> : vector<16xf32>
    %51 = vector.multi_reduction <maximumf>, %50, %cst_15 [1] : vector<16x16xf32> to vector<16xf32>
    %52 = vector.shape_cast %51 : vector<16xf32> to vector<16x1xf32>
    %53 = vector.broadcast %52 : vector<16x1xf32> to vector<16x16xf32>
    %54 = arith.subf %50, %53 : vector<16x16xf32>
    %55 = math.exp %54 : vector<16x16xf32>
    %cst_16 = arith.constant dense<0.000000e+00> : vector<16xf32>
    %56 = vector.multi_reduction <add>, %55, %cst_16 [1] : vector<16x16xf32> to vector<16xf32>
    %57 = vector.shape_cast %56 : vector<16xf32> to vector<16x1xf32>
    %58 = vector.broadcast %57 : vector<16x1xf32> to vector<16x16xf32>
    %59 = arith.divf %55, %58 : vector<16x16xf32>
    %60 = arith.truncf %59 : vector<16x16xf32> to vector<16x16xbf16>
    %cst_17 = arith.constant dense<0.000000e+00> : vector<16x8xf32>
    %61 = tpu.matmul %60, %47, %cst_17 {dimension_numbers = #tpu.dot_dimension_numbers<[1], [0], [0], [1], [0, 0, 1, 1], [], []>} : vector<16x16xbf16>, vector<16x8xbf16>, vector<16x8xf32> -> vector<16x8xf32>
    %c0_18 = arith.constant 0 : index
    %c0_19 = arith.constant 0 : index
    %62 = vector.load %arg14[%c0_18, %c0_19] : memref<16x32xf32, #tpu.memory_space<vmem>>, vector<16x8xf32>
    tpu.vector_store %arg14[%c0_18, %c0_19], %61 {strides = array<i32>} : memref<16x32xf32, #tpu.memory_space<vmem>>, vector<16x8xf32>,
    %63 = vector.extract_strided_slice %40 {offsets = [0, 8], sizes = [16, 8], strides = [1, 1]} : vector<16x96xf32> to vector<16x8xf32>
    %64 = arith.truncf %63 : vector<16x8xf32> to vector<16x8xbf16>
    %65 = vector.extract_strided_slice %40 {offsets = [0, 40], sizes = [16, 8], strides = [1, 1]} : vector<16x96xf32> to vector<16x8xf32>
    %66 = arith.truncf %65 : vector<16x8xf32> to vector<16x8xbf16>
    %67 = vector.extract_strided_slice %40 {offsets = [0, 72], sizes = [16, 8], strides = [1, 1]} : vector<16x96xf32> to vector<16x8xf32>
    %68 = arith.truncf %67 : vector<16x8xf32> to vector<16x8xbf16>
    %69 = tpu.transpose %66, [1, 0] : vector<16x8xbf16> -> vector<8x16xbf16>
    %cst_20 = arith.constant dense<0.000000e+00> : vector<16x16xf32>
    %70 = tpu.matmul %64, %69, %cst_20 {dimension_numbers = #tpu.dot_dimension_numbers<[1], [0], [0], [1], [0, 0, 1, 1], [], []>} : vector<16x8xbf16>, vector<8x16xbf16>, vector<16x16xf32> -> vector<16x16xf32>
    %71 = arith.addf %70, %41 : vector<16x16xf32>
    %cst_21 = arith.constant dense<0xFF800000> : vector<16xf32>
    %72 = vector.multi_reduction <maximumf>, %71, %cst_21 [1] : vector<16x16xf32> to vector<16xf32>
    %73 = vector.shape_cast %72 : vector<16xf32> to vector<16x1xf32>
    %74 = vector.broadcast %73 : vector<16x1xf32> to vector<16x16xf32>
    %75 = arith.subf %71, %74 : vector<16x16xf32>
    %76 = math.exp %75 : vector<16x16xf32>
    %cst_22 = arith.constant dense<0.000000e+00> : vector<16xf32>
    %77 = vector.multi_reduction <add>, %76, %cst_22 [1] : vector<16x16xf32> to vector<16xf32>
    %78 = vector.shape_cast %77 : vector<16xf32> to vector<16x1xf32>
    %79 = vector.broadcast %78 : vector<16x1xf32> to vector<16x16xf32>
    %80 = arith.divf %76, %79 : vector<16x16xf32>
    %81 = arith.truncf %80 : vector<16x16xf32> to vector<16x16xbf16>
    %cst_23 = arith.constant dense<0.000000e+00> : vector<16x8xf32>
    %82 = tpu.matmul %81, %68, %cst_23 {dimension_numbers = #tpu.dot_dimension_numbers<[1], [0], [0], [1], [0, 0, 1, 1], [], []>} : vector<16x16xbf16>, vector<16x8xbf16>, vector<16x8xf32> -> vector<16x8xf32>
    %c0_24 = arith.constant 0 : index
    %c8 = arith.constant 8 : index
    %83 = vector.load %arg14[%c0_24, %c8] : memref<16x32xf32, #tpu.memory_space<vmem>>, vector<16x8xf32>
    tpu.vector_store %arg14[%c0_24, %c8], %82 {strides = array<i32>} : memref<16x32xf32, #tpu.memory_space<vmem>>, vector<16x8xf32>,
    %84 = vector.extract_strided_slice %40 {offsets = [0, 16], sizes = [16, 8], strides = [1, 1]} : vector<16x96xf32> to vector<16x8xf32>
    %85 = arith.truncf %84 : vector<16x8xf32> to vector<16x8xbf16>
    %86 = vector.extract_strided_slice %40 {offsets = [0, 48], sizes = [16, 8], strides = [1, 1]} : vector<16x96xf32> to vector<16x8xf32>
    %87 = arith.truncf %86 : vector<16x8xf32> to vector<16x8xbf16>
    %88 = vector.extract_strided_slice %40 {offsets = [0, 80], sizes = [16, 8], strides = [1, 1]} : vector<16x96xf32> to vector<16x8xf32>
    %89 = arith.truncf %88 : vector<16x8xf32> to vector<16x8xbf16>
    %90 = tpu.transpose %87, [1, 0] : vector<16x8xbf16> -> vector<8x16xbf16>
    %cst_25 = arith.constant dense<0.000000e+00> : vector<16x16xf32>
    %91 = tpu.matmul %85, %90, %cst_25 {dimension_numbers = #tpu.dot_dimension_numbers<[1], [0], [0], [1], [0, 0, 1, 1], [], []>} : vector<16x8xbf16>, vector<8x16xbf16>, vector<16x16xf32> -> vector<16x16xf32>
    %92 = arith.addf %91, %41 : vector<16x16xf32>
    %cst_26 = arith.constant dense<0xFF800000> : vector<16xf32>
    %93 = vector.multi_reduction <maximumf>, %92, %cst_26 [1] : vector<16x16xf32> to vector<16xf32>
    %94 = vector.shape_cast %93 : vector<16xf32> to vector<16x1xf32>
    %95 = vector.broadcast %94 : vector<16x1xf32> to vector<16x16xf32>
    %96 = arith.subf %92, %95 : vector<16x16xf32>
    %97 = math.exp %96 : vector<16x16xf32>
    %cst_27 = arith.constant dense<0.000000e+00> : vector<16xf32>
    %98 = vector.multi_reduction <add>, %97, %cst_27 [1] : vector<16x16xf32> to vector<16xf32>
    %99 = vector.shape_cast %98 : vector<16xf32> to vector<16x1xf32>
    %100 = vector.broadcast %99 : vector<16x1xf32> to vector<16x16xf32>
    %101 = arith.divf %97, %100 : vector<16x16xf32>
    %102 = arith.truncf %101 : vector<16x16xf32> to vector<16x16xbf16>
    %cst_28 = arith.constant dense<0.000000e+00> : vector<16x8xf32>
    %103 = tpu.matmul %102, %89, %cst_28 {dimension_numbers = #tpu.dot_dimension_numbers<[1], [0], [0], [1], [0, 0, 1, 1], [], []>} : vector<16x16xbf16>, vector<16x8xbf16>, vector<16x8xf32> -> vector<16x8xf32>
    %c0_29 = arith.constant 0 : index
    %c16 = arith.constant 16 : index
    %104 = vector.load %arg14[%c0_29, %c16] : memref<16x32xf32, #tpu.memory_space<vmem>>, vector<16x8xf32>
    tpu.vector_store %arg14[%c0_29, %c16], %103 {strides = array<i32>} : memref<16x32xf32, #tpu.memory_space<vmem>>, vector<16x8xf32>,
    %105 = vector.extract_strided_slice %40 {offsets = [0, 24], sizes = [16, 8], strides = [1, 1]} : vector<16x96xf32> to vector<16x8xf32>
    %106 = arith.truncf %105 : vector<16x8xf32> to vector<16x8xbf16>
    %107 = vector.extract_strided_slice %40 {offsets = [0, 56], sizes = [16, 8], strides = [1, 1]} : vector<16x96xf32> to vector<16x8xf32>
    %108 = arith.truncf %107 : vector<16x8xf32> to vector<16x8xbf16>
    %109 = vector.extract_strided_slice %40 {offsets = [0, 88], sizes = [16, 8], strides = [1, 1]} : vector<16x96xf32> to vector<16x8xf32>
    %110 = arith.truncf %109 : vector<16x8xf32> to vector<16x8xbf16>
    %111 = tpu.transpose %108, [1, 0] : vector<16x8xbf16> -> vector<8x16xbf16>
    %cst_30 = arith.constant dense<0.000000e+00> : vector<16x16xf32>
    %112 = tpu.matmul %106, %111, %cst_30 {dimension_numbers = #tpu.dot_dimension_numbers<[1], [0], [0], [1], [0, 0, 1, 1], [], []>} : vector<16x8xbf16>, vector<8x16xbf16>, vector<16x16xf32> -> vector<16x16xf32>
    %113 = arith.addf %112, %41 : vector<16x16xf32>
    %cst_31 = arith.constant dense<0xFF800000> : vector<16xf32>
    %114 = vector.multi_reduction <maximumf>, %113, %cst_31 [1] : vector<16x16xf32> to vector<16xf32>
    %115 = vector.shape_cast %114 : vector<16xf32> to vector<16x1xf32>
    %116 = vector.broadcast %115 : vector<16x1xf32> to vector<16x16xf32>
    %117 = arith.subf %113, %116 : vector<16x16xf32>
    %118 = math.exp %117 : vector<16x16xf32>
    %cst_32 = arith.constant dense<0.000000e+00> : vector<16xf32>
    %119 = vector.multi_reduction <add>, %118, %cst_32 [1] : vector<16x16xf32> to vector<16xf32>
    %120 = vector.shape_cast %119 : vector<16xf32> to vector<16x1xf32>
    %121 = vector.broadcast %120 : vector<16x1xf32> to vector<16x16xf32>
    %122 = arith.divf %118, %121 : vector<16x16xf32>
    %123 = arith.truncf %122 : vector<16x16xf32> to vector<16x16xbf16>
    %cst_33 = arith.constant dense<0.000000e+00> : vector<16x8xf32>
    %124 = tpu.matmul %123, %110, %cst_33 {dimension_numbers = #tpu.dot_dimension_numbers<[1], [0], [0], [1], [0, 0, 1, 1], [], []>} : vector<16x16xbf16>, vector<16x8xbf16>, vector<16x8xf32> -> vector<16x8xf32>
    %c0_34 = arith.constant 0 : index
    %c24 = arith.constant 24 : index
    %125 = vector.load %arg14[%c0_34, %c24] : memref<16x32xf32, #tpu.memory_space<vmem>>, vector<16x8xf32>
    tpu.vector_store %arg14[%c0_34, %c24], %124 {strides = array<i32>} : memref<16x32xf32, #tpu.memory_space<vmem>>, vector<16x8xf32>,
    %c0_35 = arith.constant 0 : index
    %c0_36 = arith.constant 0 : index
    %126 = vector.load %arg14[%c0_35, %c0_36] : memref<16x32xf32, #tpu.memory_space<vmem>>, vector<16x32xf32>
    %127 = arith.truncf %126 : vector<16x32xf32> to vector<16x32xbf16>
    %c0_37 = arith.constant 0 : index
    %c0_38 = arith.constant 0 : index
    %128 = vector.load %arg4[%c0_37, %c0_38] : memref<32x32xbf16, #tpu.memory_space<vmem>>, vector<32x32xbf16>
    %cst_39 = arith.constant dense<0.000000e+00> : vector<16x32xf32>
    %129 = tpu.matmul %127, %128, %cst_39 {dimension_numbers = #tpu.dot_dimension_numbers<[1], [0], [0], [1], [0, 0, 1, 1], [], []>} : vector<16x32xbf16>, vector<32x32xbf16>, vector<16x32xf32> -> vector<16x32xf32>
    %130 = vector.broadcast %3 : vector<1x32xf32> to vector<16x32xf32>
    %131 = arith.addf %129, %130 : vector<16x32xf32>
    %132 = arith.addf %34, %131 : vector<16x32xf32>
    %cst_40 = arith.constant dense<0.000000e+00> : vector<16xf32>
    %133 = vector.multi_reduction <add>, %132, %cst_40 [1] : vector<16x32xf32> to vector<16xf32>
    %134 = vector.shape_cast %133 : vector<16xf32> to vector<16x1xf32>
    %cst_41 = arith.constant 3.200000e+01 : f32
    %135 = vector.broadcast %cst_41 : f32 to vector<16x1xf32>
    %136 = arith.divf %134, %135 : vector<16x1xf32>
    %137 = vector.broadcast %136 : vector<16x1xf32> to vector<16x32xf32>
    %138 = arith.subf %132, %137 : vector<16x32xf32>
    %139 = arith.mulf %138, %138 : vector<16x32xf32>
    %cst_42 = arith.constant dense<0.000000e+00> : vector<16xf32>
    %140 = vector.multi_reduction <add>, %139, %cst_42 [1] : vector<16x32xf32> to vector<16xf32>
    %141 = vector.shape_cast %140 : vector<16xf32> to vector<16x1xf32>
    %cst_43 = arith.constant 3.200000e+01 : f32
    %142 = vector.broadcast %cst_43 : f32 to vector<16x1xf32>
    %143 = arith.divf %141, %142 : vector<16x1xf32>
    %144 = vector.broadcast %136 : vector<16x1xf32> to vector<16x32xf32>
    %145 = arith.subf %132, %144 : vector<16x32xf32>
    %cst_44 = arith.constant 9.99999996E-13 : f32
    %146 = vector.broadcast %cst_44 : f32 to vector<16x1xf32>
    %147 = arith.addf %143, %146 : vector<16x1xf32>
    %148 = math.rsqrt %147 : vector<16x1xf32>
    %149 = vector.broadcast %148 : vector<16x1xf32> to vector<16x32xf32>
    %150 = arith.mulf %145, %149 : vector<16x32xf32>
    %151 = vector.broadcast %4 : vector<1x32xf32> to vector<16x32xf32>
    %152 = arith.mulf %150, %151 : vector<16x32xf32>
    %153 = vector.broadcast %5 : vector<1x32xf32> to vector<16x32xf32>
    %154 = arith.addf %152, %153 : vector<16x32xf32>
    %155 = arith.truncf %154 : vector<16x32xf32> to vector<16x32xbf16>
    %c0_45 = arith.constant 0 : index
    %c0_46 = arith.constant 0 : index
    %156 = vector.load %arg5[%c0_45, %c0_46] : memref<32x64xbf16, #tpu.memory_space<vmem>>, vector<32x64xbf16>
    %cst_47 = arith.constant dense<0.000000e+00> : vector<16x64xf32>
    %157 = tpu.matmul %155, %156, %cst_47 {dimension_numbers = #tpu.dot_dimension_numbers<[1], [0], [0], [1], [0, 0, 1, 1], [], []>} : vector<16x32xbf16>, vector<32x64xbf16>, vector<16x64xf32> -> vector<16x64xf32>
    %c0_48 = arith.constant 0 : index
    %c0_49 = arith.constant 0 : index
    %158 = vector.load %arg6[%c0_48, %c0_49] : memref<1x64xf32, #tpu.memory_space<vmem>>, vector<1x64xf32>
    %159 = vector.broadcast %158 : vector<1x64xf32> to vector<16x64xf32>
    %160 = arith.addf %157, %159 : vector<16x64xf32>
    %161 = arith.mulf %160, %160 : vector<16x64xf32>
    %162 = arith.mulf %160, %161 : vector<16x64xf32>
    %cst_50 = arith.constant 4.471500e-02 : f32
    %163 = vector.broadcast %cst_50 : f32 to vector<16x64xf32>
    %164 = arith.mulf %163, %162 : vector<16x64xf32>
    %165 = arith.addf %160, %164 : vector<16x64xf32>
    %cst_51 = arith.constant 0.797884583 : f32
    %166 = vector.broadcast %cst_51 : f32 to vector<16x64xf32>
    %167 = arith.mulf %166, %165 : vector<16x64xf32>
    %168 = math.tanh %167 : vector<16x64xf32>
    %cst_52 = arith.constant 1.000000e+00 : f32
    %169 = vector.broadcast %cst_52 : f32 to vector<16x64xf32>
    %170 = arith.addf %169, %168 : vector<16x64xf32>
    %cst_53 = arith.constant 5.000000e-01 : f32
    %171 = vector.broadcast %cst_53 : f32 to vector<16x64xf32>
    %172 = arith.mulf %171, %170 : vector<16x64xf32>
    %173 = arith.mulf %160, %172 : vector<16x64xf32>
    %174 = arith.truncf %173 : vector<16x64xf32> to vector<16x64xbf16>
    %c0_54 = arith.constant 0 : index
    %c0_55 = arith.constant 0 : index
    %175 = vector.load %arg7[%c0_54, %c0_55] : memref<64x32xbf16, #tpu.memory_space<vmem>>, vector<64x32xbf16>
    %cst_56 = arith.constant dense<0.000000e+00> : vector<16x32xf32>
    %176 = tpu.matmul %174, %175, %cst_56 {dimension_numbers = #tpu.dot_dimension_numbers<[1], [0], [0], [1], [0, 0, 1, 1], [], []>} : vector<16x64xbf16>, vector<64x32xbf16>, vector<16x32xf32> -> vector<16x32xf32>
    %177 = vector.broadcast %6 : vector<1x32xf32> to vector<16x32xf32>
    %178 = arith.addf %176, %177 : vector<16x32xf32>
    %179 = arith.addf %154, %178 : vector<16x32xf32>
    %cst_57 = arith.constant dense<0.000000e+00> : vector<16xf32>
    %180 = vector.multi_reduction <add>, %179, %cst_57 [1] : vector<16x32xf32> to vector<16xf32>
    %181 = vector.shape_cast %180 : vector<16xf32> to vector<16x1xf32>
    %cst_58 = arith.constant 3.200000e+01 : f32
    %182 = vector.broadcast %cst_58 : f32 to vector<16x1xf32>
    %183 = arith.divf %181, %182 : vector<16x1xf32>
    %184 = vector.broadcast %183 : vector<16x1xf32> to vector<16x32xf32>
    %185 = arith.subf %179, %184 : vector<16x32xf32>
    %186 = arith.mulf %185, %185 : vector<16x32xf32>
    %cst_59 = arith.constant dense<0.000000e+00> : vector<16xf32>
    %187 = vector.multi_reduction <add>, %186, %cst_59 [1] : vector<16x32xf32> to vector<16xf32>
    %188 = vector.shape_cast %187 : vector<16xf32> to vector<16x1xf32>
    %cst_60 = arith.constant 3.200000e+01 : f32
    %189 = vector.broadcast %cst_60 : f32 to vector<16x1xf32>
    %190 = arith.divf %188, %189 : vector<16x1xf32>
    %191 = vector.broadcast %183 : vector<16x1xf32> to vector<16x32xf32>
    %192 = arith.subf %179, %191 : vector<16x32xf32>
    %cst_61 = arith.constant 9.99999996E-13 : f32
    %193 = vector.broadcast %cst_61 : f32 to vector<16x1xf32>
    %194 = arith.addf %190, %193 : vector<16x1xf32>
    %195 = math.rsqrt %194 : vector<16x1xf32>
    %196 = vector.broadcast %195 : vector<16x1xf32> to vector<16x32xf32>
    %197 = arith.mulf %192, %196 : vector<16x32xf32>
    %198 = vector.broadcast %7 : vector<1x32xf32> to vector<16x32xf32>
    %199 = arith.mulf %197, %198 : vector<16x32xf32>
    %200 = vector.broadcast %8 : vector<1x32xf32> to vector<16x32xf32>
    %201 = arith.addf %199, %200 : vector<16x32xf32>
    %c0_62 = arith.constant 0 : index
    %202 = memref.load %arg0[%c0_62] : memref<1xi32, #tpu.memory_space<smem>>
    %203 = tpu.iota {dimensions = array<i32: 1>} : vector<2x16xi32>
    %204 = tpu.iota {dimensions = array<i32: 0>} : vector<2x16xi32>
    %c8_i32 = arith.constant 8 : i32
    %205 = vector.broadcast %c8_i32 : i32 to vector<2x16xi32>
    %206 = arith.muli %204, %205 : vector<2x16xi32>
    %207 = vector.broadcast %202 : i32 to vector<2x16xi32>
    %208 = arith.addi %206, %207 : vector<2x16xi32>
    %209 = arith.cmpi eq, %203, %208 : vector<2x16xi32>
    %cst_63 = arith.constant 1.000000e+00 : f32
    %cst_64 = arith.constant 0.000000e+00 : f32
    %210 = vector.broadcast %cst_63 : f32 to vector<2x16xf32>
    %211 = vector.broadcast %cst_64 : f32 to vector<2x16xf32>
    %212 = arith.select %209, %210, %211 : vector<2x16xi1>, vector<2x16xf32>
    %213 = arith.truncf %212 : vector<2x16xf32> to vector<2x16xbf16>
    %214 = arith.truncf %201 : vector<16x32xf32> to vector<16x32xbf16>
    %cst_65 = arith.constant dense<0.000000e+00> : vector<2x32xf32>
    %215 = tpu.matmul %213, %214, %cst_65 {dimension_numbers = #tpu.dot_dimension_numbers<[1], [0], [0], [1], [0, 0, 1, 1], [], []>} : vector<2x16xbf16>, vector<16x32xbf16>, vector<2x32xf32> -> vector<2x32xf32>
    %216 = arith.truncf %215 : vector<2x32xf32> to vector<2x32xbf16>
    %c0_66 = arith.constant 0 : index
    %c0_67 = arith.constant 0 : index
    %217 = vector.load %arg8[%c0_66, %c0_67] : memref<32x32xbf16, #tpu.memory_space<vmem>>, vector<32x32xbf16>
    %cst_68 = arith.constant dense<0.000000e+00> : vector<2x32xf32>
    %218 = tpu.matmul %216, %217, %cst_68 {dimension_numbers = #tpu.dot_dimension_numbers<[1], [0], [0], [1], [0, 0, 1, 1], [], []>} : vector<2x32xbf16>, vector<32x32xbf16>, vector<2x32xf32> -> vector<2x32xf32>
    %219 = vector.broadcast %9 : vector<1x32xf32> to vector<2x32xf32>
    %220 = arith.addf %218, %219 : vector<2x32xf32>
    %221 = arith.mulf %220, %220 : vector<2x32xf32>
    %222 = arith.mulf %220, %221 : vector<2x32xf32>
    %cst_69 = arith.constant 4.471500e-02 : f32
    %223 = vector.broadcast %cst_69 : f32 to vector<2x32xf32>
    %224 = arith.mulf %223, %222 : vector<2x32xf32>
    %225 = arith.addf %220, %224 : vector<2x32xf32>
    %cst_70 = arith.constant 0.797884583 : f32
    %226 = vector.broadcast %cst_70 : f32 to vector<2x32xf32>
    %227 = arith.mulf %226, %225 : vector<2x32xf32>
    %228 = math.tanh %227 : vector<2x32xf32>
    %cst_71 = arith.constant 1.000000e+00 : f32
    %229 = vector.broadcast %cst_71 : f32 to vector<2x32xf32>
    %230 = arith.addf %229, %228 : vector<2x32xf32>
    %cst_72 = arith.constant 5.000000e-01 : f32
    %231 = vector.broadcast %cst_72 : f32 to vector<2x32xf32>
    %232 = arith.mulf %231, %230 : vector<2x32xf32>
    %233 = arith.mulf %220, %232 : vector<2x32xf32>
    %cst_73 = arith.constant dense<0.000000e+00> : vector<2xf32>
    %234 = vector.multi_reduction <add>, %233, %cst_73 [1] : vector<2x32xf32> to vector<2xf32>
    %235 = vector.shape_cast %234 : vector<2xf32> to vector<2x1xf32>
    %cst_74 = arith.constant 3.200000e+01 : f32
    %236 = vector.broadcast %cst_74 : f32 to vector<2x1xf32>
    %237 = arith.divf %235, %236 : vector<2x1xf32>
    %238 = vector.broadcast %237 : vector<2x1xf32> to vector<2x32xf32>
    %239 = arith.subf %233, %238 : vector<2x32xf32>
    %240 = arith.mulf %239, %239 : vector<2x32xf32>
    %cst_75 = arith.constant dense<0.000000e+00> : vector<2xf32>
    %241 = vector.multi_reduction <add>, %240, %cst_75 [1] : vector<2x32xf32> to vector<2xf32>
    %242 = vector.shape_cast %241 : vector<2xf32> to vector<2x1xf32>
    %cst_76 = arith.constant 3.200000e+01 : f32
    %243 = vector.broadcast %cst_76 : f32 to vector<2x1xf32>
    %244 = arith.divf %242, %243 : vector<2x1xf32>
    %245 = vector.broadcast %237 : vector<2x1xf32> to vector<2x32xf32>
    %246 = arith.subf %233, %245 : vector<2x32xf32>
    %cst_77 = arith.constant 9.99999996E-13 : f32
    %247 = vector.broadcast %cst_77 : f32 to vector<2x1xf32>
    %248 = arith.addf %244, %247 : vector<2x1xf32>
    %249 = math.rsqrt %248 : vector<2x1xf32>
    %250 = vector.broadcast %249 : vector<2x1xf32> to vector<2x32xf32>
    %251 = arith.mulf %246, %250 : vector<2x32xf32>
    %252 = vector.broadcast %10 : vector<1x32xf32> to vector<2x32xf32>
    %253 = arith.mulf %251, %252 : vector<2x32xf32>
    %254 = vector.broadcast %11 : vector<1x32xf32> to vector<2x32xf32>
    %255 = arith.addf %253, %254 : vector<2x32xf32>
    %256 = arith.truncf %255 : vector<2x32xf32> to vector<2x32xbf16>
    %c0_78 = arith.constant 0 : index
    %c0_79 = arith.constant 0 : index
    %257 = vector.load %arg9[%c0_78, %c0_79] : memref<32x128xbf16, #tpu.memory_space<vmem>>, vector<32x128xbf16>
    %cst_80 = arith.constant dense<0.000000e+00> : vector<2x128xf32>
    %258 = tpu.matmul %256, %257, %cst_80 {dimension_numbers = #tpu.dot_dimension_numbers<[1], [0], [0], [1], [0, 0, 1, 1], [], []>} : vector<2x32xbf16>, vector<32x128xbf16>, vector<2x128xf32> -> vector<2x128xf32>
    %c0_81 = arith.constant 0 : index
    %c0_82 = arith.constant 0 : index
    %259 = vector.load %arg10[%c0_81, %c0_82] : memref<1x128xf32, #tpu.memory_space<vmem>>, vector<1x128xf32>
    %260 = vector.broadcast %259 : vector<1x128xf32> to vector<2x128xf32>
    %261 = arith.addf %258, %260 : vector<2x128xf32>
    %cst_83 = arith.constant dense<0xFF800000> : vector<2xf32>
    %262 = vector.multi_reduction <maximumf>, %261, %cst_83 [1] : vector<2x128xf32> to vector<2xf32>
    %263 = vector.shape_cast %262 : vector<2xf32> to vector<2x1xf32>
    %264 = vector.broadcast %263 : vector<2x1xf32> to vector<2x128xf32>
    %265 = arith.subf %261, %264 : vector<2x128xf32>
    %266 = math.exp %265 : vector<2x128xf32>
    %cst_84 = arith.constant dense<0.000000e+00> : vector<2xf32>
    %267 = vector.multi_reduction <add>, %266, %cst_84 [1] : vector<2x128xf32> to vector<2xf32>
    %268 = vector.shape_cast %267 : vector<2xf32> to vector<2x1xf32>
    %269 = vector.broadcast %268 : vector<2x1xf32> to vector<2x128xf32>
    %270 = arith.divf %266, %269 : vector<2x128xf32>
    %c0_85 = arith.constant 0 : index
    %c0_86 = arith.constant 0 : index
    %271 = vector.load %arg13[%c0_85, %c0_86] : memref<2x128xf32, #tpu.memory_space<vmem>>, vector<2x128xf32>
    tpu.vector_store %arg13[%c0_85, %c0_86], %270 {strides = array<i32>} : memref<2x128xf32, #tpu.memory_space<vmem>>, vector<2x128xf32>,
    return
  }
}

</mosaic_0001>

<llo_original>
// kernel: tpu_custom_call.1
$region0: #{tpu_custom_call.1}
  #allocation0 [shape = 'u32[]', space=smem, size = 0x4, offset = 0x4, fixed_abs, tag = 'smem constant byte address 0x4 - core index']
  #allocation1 [shape = 'u32[144,128]{1,0:T(1,128)}', space=vmem, size = 0x12000, scoped, tag = 'internal scratch']
  #allocation2 [shape = 'f32[16,32]{1,0:T(8,128)}', space=vmem, size = 0x2000, scoped, tag = 'scratch operand']
  #allocation3 [shape = 's32[1]{0:T(128)S(6)}', space=smem, size = 0x200, scoped, tag = 'scoped memory for tpu_custom_call.1']
  %s0 = inlined_call_operand.<no memory space> [shape: s32[1], index: 0, kind: input, shape index: {}]
  %s1 = inlined_call_operand.vmem [shape: f32[16,32], index: 1, kind: input, shape index: {}]
  %s2 = inlined_call_operand.vmem [shape: bf16[32,96], index: 2, kind: input, shape index: {}]
  %s3 = inlined_call_operand.vmem [shape: f32[1,96], index: 3, kind: input, shape index: {}]
  %s4 = inlined_call_operand.vmem [shape: bf16[32,32], index: 4, kind: input, shape index: {}]
  %s5 = inlined_call_operand.hbm [shape: bf16[32,64], index: 5, kind: input, shape index: {}]
  %s6 = inlined_call_operand.vmem [shape: f32[1,64], index: 6, kind: input, shape index: {}]
  %s7 = inlined_call_operand.vmem [shape: bf16[64,32], index: 7, kind: input, shape index: {}]
  %s8 = inlined_call_operand.hbm [shape: bf16[32,32], index: 8, kind: input, shape index: {}]
  %s9 = inlined_call_operand.vmem [shape: bf16[32,128], index: 9, kind: input, shape index: {}]
  %s10 = inlined_call_operand.vmem [shape: f32[1,128], index: 10, kind: input, shape index: {}]
  %s11 = inlined_call_operand.hbm [shape: f32[11,32], index: 11, kind: input, shape index: {}]
  %s12 = inlined_call_operand.hbm [shape: f32[16,16], index: 12, kind: input, shape index: {}]
  %s13 = inlined_call_operand.hbm [shape: f32[2,128], index: 13, kind: output, shape index: {}]
  %s14 = sld [smem:[#allocation0]]
  $region78: #{tpu_custom_call.1} parent=0
    _
  %s16 = ssub.s32 1, %s14
  %s17 = scalar_select 0, %s16, %s14
  %18 = sst [smem:[#allocation3]] %s0
  $region1: #{tpu_custom_call.1} parent=0
    #allocation4 [shape = 'u8[8192]{0}', space=vmem, size = 0x2000, scoped, tag = 'input window, operand 5, single buffered']
    #allocation5 [shape = 's32[1]{0}', space=sflag, size = 0x4, scoped, tag = 'scoped memory for tpu_custom_call.1']
    #allocation6 [shape = 's32[1]{0}', space=sflag, size = 0x4, scoped, tag = 'scoped memory for tpu_custom_call.1']
    #allocation7 [shape = 'u8[8192]{0}', space=vmem, size = 0x2000, scoped, tag = 'input window, operand 8, single buffered']
    #allocation8 [shape = 's32[1]{0}', space=sflag, size = 0x4, scoped, tag = 'scoped memory for tpu_custom_call.1']
    #allocation9 [shape = 'u8[8192]{0}', space=vmem, size = 0x2000, scoped, tag = 'input window, operand 11, single buffered']
    #allocation10 [shape = 'u8[8192]{0}', space=vmem, size = 0x2000, scoped, tag = 'input window, operand 12, single buffered']
    #allocation11 [shape = 's32[1]{0}', space=sflag, size = 0x4, scoped, tag = 'scoped memory for tpu_custom_call.1']
    #allocation12 [shape = 'u8[1024]{0}', space=vmem, size = 0x400, scoped, tag = 'output window, operand 0, single buffered']
    %19 = vsyncpa [#allocation5], 0
    %20 = vsyncpa [#allocation8], 0
    %21 = vsyncpa [#allocation11], 0
    %22 = vsyncpa [#allocation6], 0
    // Predicated region
    $region2: #{tpu_custom_call.1} parent=1 // pred_check
      _
    $region3: #{tpu_custom_call.1} parent=1 // pred_check_branch
      %24 = sbr.rel (0) target = $region5
    $region4: #{tpu_custom_call.1} parent=1 // pred_region
      _
    $region5: #{tpu_custom_call.1} parent=1 // pred_fallthru
      _
    // Predicated region
    $region6: #{tpu_custom_call.1} parent=1 // pred_check
      _
    $region7: #{tpu_custom_call.1} parent=1 // pred_check_branch
      %26 = sbr.rel (0) target = $region9
    $region8: #{tpu_custom_call.1} parent=1 // pred_region
      _
    $region9: #{tpu_custom_call.1} parent=1 // pred_fallthru
      _
    // Predicated region
    $region10: #{tpu_custom_call.1} parent=1 // pred_check
      _
    $region11: #{tpu_custom_call.1} parent=1 // pred_check_branch
      %28 = sbr.rel (0) target = $region13
    $region12: #{tpu_custom_call.1} parent=1 // pred_region
      _
    $region13: #{tpu_custom_call.1} parent=1 // pred_fallthru
      _
    // Predicated region
    $region14: #{tpu_custom_call.1} parent=1 // pred_check
      _
    $region15: #{tpu_custom_call.1} parent=1 // pred_check_branch
      %30 = sbr.rel (0) target = $region17
    $region16: #{tpu_custom_call.1} parent=1 // pred_region
      _
    $region17: #{tpu_custom_call.1} parent=1 // pred_fallthru
      _
    // Predicated region
    $region18: #{tpu_custom_call.1} parent=1 // pred_check
      _
    $region19: #{tpu_custom_call.1} parent=1 // pred_check_branch
      %32 = sbr.rel (0) target = $region21
    $region20: #{tpu_custom_call.1} parent=1 // pred_region
      _
    $region21: #{tpu_custom_call.1} parent=1 // pred_fallthru
      _
    // Predicated region
    $region22: #{tpu_custom_call.1} parent=1 // pred_check
      _
    $region23: #{tpu_custom_call.1} parent=1 // pred_check_branch
      %34 = sbr.rel (0) target = $region25
    $region24: #{tpu_custom_call.1} parent=1 // pred_region
      %s36 = ssub.s32 256, 256
      %37 = vsyncadd [#allocation5], %s36
      %s38 = sshll.u32 [#allocation4], 4
      %s39 = int_to_ptr.vmem [resolvable:$true] %s38
      %44 = dma.hbm_to_vmem [thread:$0]  %s5, 256, %s39, [#allocation5], 64, 64, 4
    $region25: #{tpu_custom_call.1} parent=1 // pred_fallthru
      _
    // Predicated region
    $region26: #{tpu_custom_call.1} parent=1 // pred_check
      _
    $region27: #{tpu_custom_call.1} parent=1 // pred_check_branch
      %46 = sbr.rel (0) target = $region29
    $region28: #{tpu_custom_call.1} parent=1 // pred_region
      _
    $region29: #{tpu_custom_call.1} parent=1 // pred_fallthru
      _
    // Predicated region
    $region30: #{tpu_custom_call.1} parent=1 // pred_check
      _
    $region31: #{tpu_custom_call.1} parent=1 // pred_check_branch
      %48 = sbr.rel (0) target = $region33
    $region32: #{tpu_custom_call.1} parent=1 // pred_region
      _
    $region33: #{tpu_custom_call.1} parent=1 // pred_fallthru
      _
    // Predicated region
    $region34: #{tpu_custom_call.1} parent=1 // pred_check
      _
    $region35: #{tpu_custom_call.1} parent=1 // pred_check_branch
      %50 = sbr.rel (0) target = $region37
    $region36: #{tpu_custom_call.1} parent=1 // pred_region
      %s52 = ssub.s32 256, 256
      %53 = vsyncadd [#allocation8], %s52
      %s54 = sshll.u32 [#allocation7], 4
      %s55 = int_to_ptr.vmem [resolvable:$true] %s54
      %60 = dma.hbm_to_vmem [thread:$0]  %s8, 256, %s55, [#allocation8], 64, 64, 4
    $region37: #{tpu_custom_call.1} parent=1 // pred_fallthru
      _
    // Predicated region
    $region38: #{tpu_custom_call.1} parent=1 // pred_check
      _
    $region39: #{tpu_custom_call.1} parent=1 // pred_check_branch
      %62 = sbr.rel (0) target = $region41
    $region40: #{tpu_custom_call.1} parent=1 // pred_region
      _
    $region41: #{tpu_custom_call.1} parent=1 // pred_fallthru
      _
    // Predicated region
    $region42: #{tpu_custom_call.1} parent=1 // pred_check
      _
    $region43: #{tpu_custom_call.1} parent=1 // pred_check_branch
      %64 = sbr.rel (0) target = $region45
    $region44: #{tpu_custom_call.1} parent=1 // pred_region
      _
    $region45: #{tpu_custom_call.1} parent=1 // pred_fallthru
      _
    // Predicated region
    $region46: #{tpu_custom_call.1} parent=1 // pred_check
      _
    $region47: #{tpu_custom_call.1} parent=1 // pred_check_branch
      %66 = sbr.rel (0) target = $region49
    $region48: #{tpu_custom_call.1} parent=1 // pred_region
      %s68 = ssub.s32 256, 256
      %69 = vsyncadd [#allocation8], %s68
      %s70 = sshll.u32 [#allocation9], 4
      %s71 = int_to_ptr.vmem [resolvable:$true] %s70
      %76 = dma.hbm_to_vmem [thread:$0]  %s11, 256, %s71, [#allocation8], 128, 128, 8
    $region49: #{tpu_custom_call.1} parent=1 // pred_fallthru
      _
    // Predicated region
    $region50: #{tpu_custom_call.1} parent=1 // pred_check
      _
    $region51: #{tpu_custom_call.1} parent=1 // pred_check_branch
      %78 = sbr.rel (0) target = $region53
    $region52: #{tpu_custom_call.1} parent=1 // pred_region
      %s80 = ssub.s32 256, 256
      %81 = vsyncadd [#allocation11], %s80
      %s82 = sshll.u32 [#allocation10], 4
      %s83 = int_to_ptr.vmem [resolvable:$true] %s82
      %88 = dma.hbm_to_vmem [thread:$0]  %s12, 256, %s83, [#allocation11], 128, 128, 8
    $region53: #{tpu_custom_call.1} parent=1 // pred_fallthru
      _
    // Predicated region
    $region54: #{tpu_custom_call.1} parent=1 // pred_check
      _
    $region55: #{tpu_custom_call.1} parent=1 // pred_check_branch
      %90 = sbr.rel (0) target = $region57
    $region56: #{tpu_custom_call.1} parent=1 // pred_region
      %91 = dma.done [#allocation5], 256
    $region57: #{tpu_custom_call.1} parent=1 // pred_fallthru
      _
    // Predicated region
    $region58: #{tpu_custom_call.1} parent=1 // pred_check
      _
    $region59: #{tpu_custom_call.1} parent=1 // pred_check_branch
      %93 = sbr.rel (0) target = $region61
    $region60: #{tpu_custom_call.1} parent=1 // pred_region
      %94 = dma.done [#allocation8], 256
    $region61: #{tpu_custom_call.1} parent=1 // pred_fallthru
      _
    // Predicated region
    $region62: #{tpu_custom_call.1} parent=1 // pred_check
      _
    $region63: #{tpu_custom_call.1} parent=1 // pred_check_branch
      %96 = sbr.rel (0) target = $region65
    $region64: #{tpu_custom_call.1} parent=1 // pred_region
      %97 = dma.done [#allocation8], 256
    $region65: #{tpu_custom_call.1} parent=1 // pred_fallthru
      _
    // Predicated region
    $region66: #{tpu_custom_call.1} parent=1 // pred_check
      _
    $region67: #{tpu_custom_call.1} parent=1 // pred_check_branch
      %99 = sbr.rel (0) target = $region69
    $region68: #{tpu_custom_call.1} parent=1 // pred_region
      %100 = dma.done [#allocation11], 256
    $region69: #{tpu_custom_call.1} parent=1 // pred_fallthru
      _
    %v102 = vld [vmem:[#allocation9] sm:$0xff]
    %v103 = vld [vmem:[#allocation9 + $0x8] sm:$0x7]
    %v104 = vld [vmem:[%s1] sm:$0xff]
    %v105 = vld [vmem:[%s1 + $0x8] sm:$0xff]
    %vm106 = vcmask 261120
    %v107 = vsel %vm106, %v104, 0.0
    %108 = vadd.xlane.f32.xlu0 %v107
    %v109 = vpop.xlane.xlu0 %108
    %v110 = vsel %vm106, %v105, 0.0
    %111 = vadd.xlane.f32.xlu0 %v110
    %v112 = vpop.xlane.xlu0 %111
    %v113 = vrcp.pop 32.0
    %v114 = vmul.f32 %v109, %v113
    %v115 = vmul.f32 %v112, %v113
    %v116 = vsub.f32 %v104, %v114
    %v117 = vsub.f32 %v105, %v115
    %v118 = vmul.f32 %v116, %v116
    %v119 = vmul.f32 %v117, %v117
    %v120 = vsel %vm106, %v118, 0.0
    %121 = vadd.xlane.f32.xlu0 %v120
    %v122 = vpop.xlane.xlu0 %121
    %v123 = vsel %vm106, %v119, 0.0
    %124 = vadd.xlane.f32.xlu0 %v123
    %v125 = vpop.xlane.xlu0 %124
    %v126 = vmul.f32 %v122, %v113
    %v127 = vmul.f32 %v125, %v113
    %v128 = vadd.f32 %v126, 1e-12
    %v129 = vadd.f32 %v127, 1e-12
    %v130 = vrsqrt.pop %v128
    %v131 = vrsqrt.pop %v129
    %v132 = vmul.f32 %v116, %v130
    %v133 = vmul.f32 %v117, %v131
    %v134 = vlaneseq
    %v135 = vshrl.u32 %v134, 7
    %v136 = vsub.s32 0, %v135
    %v137 = vrot.slane %v102, %v136
    %v138 = vmul.f32 %v132, %v137
    %v139 = vmul.f32 %v133, %v137
    %v140 = vlaneseq
    %v141 = vshrl.u32 %v140, 7
    %v142 = vsub.s32 1, %v141
    %v143 = vrot.slane %v102, %v142
    %v144 = vadd.f32 %v138, %v143
    %v145 = vadd.f32 %v139, %v143
    %v146 = vpack.c.bf16 %v145, %v144
    %v147 = vld [vmem:[%s2] sm:$0xf]
    %v148 = vld [vmem:[%s2 + $0x4] sm:$0xf]
    %v149 = vld [vmem:[%s2 + $0x8] sm:$0xf]
    %v150 = vld [vmem:[%s2 + $0xc] sm:$0xf]
    %v151 = vld [vmem:[%s3] sm:$0x1]
    %v153 = vlaneseq
    %v154 = vshrl.u32 %v153, 7
    %v155 = vsub.s32 0, %v154
    %v156 = vrot.slane %v151, %v155
    %v162 = vunpack.c.l.b16 %v147
    %v163 = vunpack.c.l.b16 %v148
    %v164 = vunpack.c.l.b16 %v149
    %v165 = vunpack.c.l.b16 %v150
    %v166 = vpack.c.b16 %v163, %v162
    %v167 = vpack.c.b16 %v165, %v164
    %v171 = vsel %vm106, %v146, 0
    %173 = vmatprep.subr.bf16.mxu0 0
    %174 = vmatpush1.bf16.msra.mxu0 %v166
    %175 = vmatprep.subr.bf16.mxu0 0
    %176 = vmatpush1.bf16.msra.mxu0 %v167
    %177 = vmatprep.subr.bf16.mxu0 0
    %178 = vmatpush1.bf16.msra.mxu0 0
    %179 = vmatprep.subr.bf16.mxu0 0
    %180 = vmatpush1.bf16.msra.mxu0 0
    %181 = vmatprep.subr.bf16.mxu0 0
    %182 = vmatpush1.bf16.msra.mxu0 0
    %183 = vmatprep.subr.bf16.mxu0 0
    %184 = vmatpush1.bf16.msra.mxu0 0
    %185 = vmatprep.subr.bf16.mxu0 0
    %186 = vmatpush1.bf16.msra.mxu0 0
    %187 = vmatprep.subr.bf16.mxu0 0
    %188 = vmatpush1.bf16.msra.mxu0 0
    %189 = vmatprep.subr.bf16.mxu0 0
    %190 = vmatpush1.bf16.msra.mxu0 0
    %191 = vmatprep.subr.bf16.mxu0 0
    %192 = vmatpush1.bf16.msra.mxu0 0
    %193 = vmatprep.subr.bf16.mxu0 0
    %194 = vmatpush1.bf16.msra.mxu0 0
    %195 = vmatprep.subr.bf16.mxu0 0
    %196 = vmatpush1.bf16.msra.mxu0 0
    %197 = vmatprep.subr.bf16.mxu0 0
    %198 = vmatpush1.bf16.msra.mxu0 0
    %199 = vmatprep.subr.bf16.mxu0 0
    %200 = vmatpush1.bf16.msra.mxu0 0
    %201 = vmatprep.subr.bf16.mxu0 0
    %202 = vmatpush1.bf16.msra.mxu0 0
    %203 = vmatprep.subr.bf16.mxu0 0
    %204 = vmatpush1.bf16.msra.mxu0 0
    %205 = vmatprep.mubr.bf16.mxu0 0
    %206 = vmatmul.mubr.bf16.gmra.mrb[0].mxu0 %v171
    %v207 = vpop.f32.mrb[0].mxu0
    %v208 = vadd.f32 %v156, %v207
    %v209 = vpop.f32.mrb[0].mxu0
    %v210 = vpop.f32.mrb[0].mxu0
    %v211 = vadd.f32 %v156, %v210
    %v212 = vpop.f32.mrb[0].mxu0
    %213 = vdwg.mxu0
    %v214 = vld [vmem:[#allocation10] sm:$0xff]
    %v215 = vld [vmem:[#allocation10 + $0x8] sm:$0xff]
    %v216 = vpack.c.bf16 %v211, %v208
    %218 = vrot.lane.b32.xlu0 %v216, 96
    %v219 = vpop.permute.xlu0 %218
    %vm220 = vcmask 64512
    %v222 = vsel %vm220, %v216, 0
    %v225 = vsel %vm220, %v219, 0
    %227 = vmatprep.subr.bf16.mxu0 0
    %228 = vmatpush1.bf16.xpose.msra.mxu0 %v225
    %229 = vmatprep.subr.bf16.mxu0 0
    %230 = vmatpush1.bf16.xpose.msra.mxu0 0
    %231 = vmatprep.subr.bf16.mxu0 0
    %232 = vmatpush1.bf16.xpose.msra.mxu0 0
    %233 = vmatprep.subr.bf16.mxu0 0
    %234 = vmatpush1.bf16.xpose.msra.mxu0 0
    %235 = vmatprep.subr.bf16.mxu0 0
    %236 = vmatpush1.bf16.xpose.msra.mxu0 0
    %237 = vmatprep.subr.bf16.mxu0 0
    %238 = vmatpush1.bf16.xpose.msra.mxu0 0
    %239 = vmatprep.subr.bf16.mxu0 0
    %240 = vmatpush1.bf16.xpose.msra.mxu0 0
    %241 = vmatprep.subr.bf16.mxu0 0
    %242 = vmatpush1.bf16.xpose.msra.mxu0 0
    %243 = vmatprep.subr.bf16.mxu0 0
    %244 = vmatpush1.bf16.xpose.msra.mxu0 0
    %245 = vmatprep.subr.bf16.mxu0 0
    %246 = vmatpush1.bf16.xpose.msra.mxu0 0
    %247 = vmatprep.subr.bf16.mxu0 0
    %248 = vmatpush1.bf16.xpose.msra.mxu0 0
    %249 = vmatprep.subr.bf16.mxu0 0
    %250 = vmatpush1.bf16.xpose.msra.mxu0 0
    %251 = vmatprep.subr.bf16.mxu0 0
    %252 = vmatpush1.bf16.xpose.msra.mxu0 0
    %253 = vmatprep.subr.bf16.mxu0 0
    %254 = vmatpush1.bf16.xpose.msra.mxu0 0
    %255 = vmatprep.subr.bf16.mxu0 0
    %256 = vmatpush1.bf16.xpose.msra.mxu0 0
    %257 = vmatprep.subr.bf16.mxu0 0
    %258 = vmatpush1.bf16.xpose.msra.mxu0 0
    %259 = vmatprep.mubr.bf16.mxu0 0
    %260 = vmatmul.mubr.bf16.gmra.mrb[0].mxu0 %v222
    %v261 = vpop.f32.mrb[0].mxu0
    %v262 = vadd.f32 %v214, %v261
    %v263 = vpop.f32.mrb[0].mxu0
    %v264 = vpop.f32.mrb[0].mxu0
    %v265 = vadd.f32 %v215, %v264
    %v266 = vpop.f32.mrb[0].mxu0
    %267 = vdwg.mxu0
    %vm268 = vcmask 130048
    %v269 = vsel %vm268, %v262, -inf
    %270 = vmax.xlane.f32.xlu0 %v269
    %v271 = vpop.xlane.xlu0 %270
    %v272 = vsel %vm268, %v265, -inf
    %273 = vmax.xlane.f32.xlu0 %v272
    %v274 = vpop.xlane.xlu0 %273
    %v275 = vsub.f32 %v262, %v271
    %v276 = vsub.f32 %v265, %v274
    %v277 = vmul.f32 %v275, 1.442695
    %v278 = vpow.pop %v277
    %v279 = vmul.f32 %v276, 1.442695
    %v280 = vpow.pop %v279
    %v281 = vsel %vm268, %v278, 0.0
    %282 = vadd.xlane.f32.xlu0 %v281
    %v283 = vpop.xlane.xlu0 %282
    %v284 = vsel %vm268, %v280, 0.0
    %285 = vadd.xlane.f32.xlu0 %v284
    %v286 = vpop.xlane.xlu0 %285
    %v287 = vrcp.pop %v283
    %v288 = vmul.f32 %v278, %v287
    %v289 = vrcp.pop %v286
    %v290 = vmul.f32 %v280, %v289
    %v291 = vpack.c.bf16 %v290, %v288
    %292 = vrot.lane.b32.xlu0 %v216, 64
    %v293 = vpop.permute.xlu0 %292
    %v296 = vsel %vm268, %v291, 0
    %298 = vmatprep.subr.bf16.mxu0 0
    %299 = vmatpush1.bf16.msra.mxu0 %v293
    %300 = vmatprep.subr.bf16.mxu0 0
    %301 = vmatpush1.bf16.msra.mxu0 0
    %302 = vmatprep.subr.bf16.mxu0 0
    %303 = vmatpush1.bf16.msra.mxu0 0
    %304 = vmatprep.subr.bf16.mxu0 0
    %305 = vmatpush1.bf16.msra.mxu0 0
    %306 = vmatprep.subr.bf16.mxu0 0
    %307 = vmatpush1.bf16.msra.mxu0 0
    %308 = vmatprep.subr.bf16.mxu0 0
    %309 = vmatpush1.bf16.msra.mxu0 0
    %310 = vmatprep.subr.bf16.mxu0 0
    %311 = vmatpush1.bf16.msra.mxu0 0
    %312 = vmatprep.subr.bf16.mxu0 0
    %313 = vmatpush1.bf16.msra.mxu0 0
    %314 = vmatprep.subr.bf16.mxu0 0
    %315 = vmatpush1.bf16.msra.mxu0 0
    %316 = vmatprep.subr.bf16.mxu0 0
    %317 = vmatpush1.bf16.msra.mxu0 0
    %318 = vmatprep.subr.bf16.mxu0 0
    %319 = vmatpush1.bf16.msra.mxu0 0
    %320 = vmatprep.subr.bf16.mxu0 0
    %321 = vmatpush1.bf16.msra.mxu0 0
    %322 = vmatprep.subr.bf16.mxu0 0
    %323 = vmatpush1.bf16.msra.mxu0 0
    %324 = vmatprep.subr.bf16.mxu0 0
    %325 = vmatpush1.bf16.msra.mxu0 0
    %326 = vmatprep.subr.bf16.mxu0 0
    %327 = vmatpush1.bf16.msra.mxu0 0
    %328 = vmatprep.subr.bf16.mxu0 0
    %329 = vmatpush1.bf16.msra.mxu0 0
    %330 = vmatprep.mubr.bf16.mxu0 0
    %331 = vmatmul.mubr.bf16.gmra.mrb[0].mxu0 %v296
    %v332 = vpop.f32.mrb[0].mxu0
    %v333 = vadd.f32 0.0, %v332
    %v334 = vpop.f32.mrb[0].mxu0
    %v335 = vpop.f32.mrb[0].mxu0
    %v336 = vadd.f32 0.0, %v335
    %v337 = vpop.f32.mrb[0].mxu0
    %338 = vdwg.mxu0
    %339 = vst.msk [vmem:[#allocation2] sm:$0xff] %vm220, %v333
    %340 = vst.msk [vmem:[#allocation2 + $0x8] sm:$0xff] %vm220, %v336
    %341 = vrot.lane.b32.xlu0 %v216, 120
    %v342 = vpop.permute.xlu0 %341
    %343 = vrot.lane.b32.xlu0 %v216, 88
    %v344 = vpop.permute.xlu0 %343
    %v346 = vsel %vm220, %v342, 0
    %v349 = vsel %vm220, %v344, 0
    %351 = vmatprep.subr.bf16.mxu0 0
    %352 = vmatpush1.bf16.xpose.msra.mxu0 %v349
    %353 = vmatprep.subr.bf16.mxu0 0
    %354 = vmatpush1.bf16.xpose.msra.mxu0 0
    %355 = vmatprep.subr.bf16.mxu0 0
    %356 = vmatpush1.bf16.xpose.msra.mxu0 0
    %357 = vmatprep.subr.bf16.mxu0 0
    %358 = vmatpush1.bf16.xpose.msra.mxu0 0
    %359 = vmatprep.subr.bf16.mxu0 0
    %360 = vmatpush1.bf16.xpose.msra.mxu0 0
    %361 = vmatprep.subr.bf16.mxu0 0
    %362 = vmatpush1.bf16.xpose.msra.mxu0 0
    %363 = vmatprep.subr.bf16.mxu0 0
    %364 = vmatpush1.bf16.xpose.msra.mxu0 0
    %365 = vmatprep.subr.bf16.mxu0 0
    %366 = vmatpush1.bf16.xpose.msra.mxu0 0
    %367 = vmatprep.subr.bf16.mxu0 0
    %368 = vmatpush1.bf16.xpose.msra.mxu0 0
    %369 = vmatprep.subr.bf16.mxu0 0
    %370 = vmatpush1.bf16.xpose.msra.mxu0 0
    %371 = vmatprep.subr.bf16.mxu0 0
    %372 = vmatpush1.bf16.xpose.msra.mxu0 0
    %373 = vmatprep.subr.bf16.mxu0 0
    %374 = vmatpush1.bf16.xpose.msra.mxu0 0
    %375 = vmatprep.subr.bf16.mxu0 0
    %376 = vmatpush1.bf16.xpose.msra.mxu0 0
    %377 = vmatprep.subr.bf16.mxu0 0
    %378 = vmatpush1.bf16.xpose.msra.mxu0 0
    %379 = vmatprep.subr.bf16.mxu0 0
    %380 = vmatpush1.bf16.xpose.msra.mxu0 0
    %381 = vmatprep.subr.bf16.mxu0 0
    %382 = vmatpush1.bf16.xpose.msra.mxu0 0
    %383 = vmatprep.mubr.bf16.mxu0 0
    %384 = vmatmul.mubr.bf16.gmra.mrb[0].mxu0 %v346
    %v385 = vpop.f32.mrb[0].mxu0
    %v386 = vadd.f32 %v214, %v385
    %v387 = vpop.f32.mrb[0].mxu0
    %v388 = vpop.f32.mrb[0].mxu0
    %v389 = vadd.f32 %v215, %v388
    %v390 = vpop.f32.mrb[0].mxu0
    %391 = vdwg.mxu0
    %v392 = vsel %vm268, %v386, -inf
    %393 = vmax.xlane.f32.xlu0 %v392
    %v394 = vpop.xlane.xlu0 %393
    %v395 = vsel %vm268, %v389, -inf
    %396 = vmax.xlane.f32.xlu0 %v395
    %v397 = vpop.xlane.xlu0 %396
    %v398 = vsub.f32 %v386, %v394
    %v399 = vsub.f32 %v389, %v397
    %v400 = vmul.f32 %v398, 1.442695
    %v401 = vpow.pop %v400
    %v402 = vmul.f32 %v399, 1.442695
    %v403 = vpow.pop %v402
    %v404 = vsel %vm268, %v401, 0.0
    %405 = vadd.xlane.f32.xlu0 %v404
    %v406 = vpop.xlane.xlu0 %405
    %v407 = vsel %vm268, %v403, 0.0
    %408 = vadd.xlane.f32.xlu0 %v407
    %v409 = vpop.xlane.xlu0 %408
    %v410 = vrcp.pop %v406
    %v411 = vmul.f32 %v401, %v410
    %v412 = vrcp.pop %v409
    %v413 = vmul.f32 %v403, %v412
    %v414 = vpack.c.bf16 %v413, %v411
    %415 = vrot.lane.b32.xlu0 %v216, 56
    %v416 = vpop.permute.xlu0 %415
    %v419 = vsel %vm268, %v414, 0
    %421 = vmatprep.subr.bf16.mxu0 0
    %422 = vmatpush1.bf16.msra.mxu0 %v416
    %423 = vmatprep.subr.bf16.mxu0 0
    %424 = vmatpush1.bf16.msra.mxu0 0
    %425 = vmatprep.subr.bf16.mxu0 0
    %426 = vmatpush1.bf16.msra.mxu0 0
    %427 = vmatprep.subr.bf16.mxu0 0
    %428 = vmatpush1.bf16.msra.mxu0 0
    %429 = vmatprep.subr.bf16.mxu0 0
    %430 = vmatpush1.bf16.msra.mxu0 0
    %431 = vmatprep.subr.bf16.mxu0 0
    %432 = vmatpush1.bf16.msra.mxu0 0
    %433 = vmatprep.subr.bf16.mxu0 0
    %434 = vmatpush1.bf16.msra.mxu0 0
    %435 = vmatprep.subr.bf16.mxu0 0
    %436 = vmatpush1.bf16.msra.mxu0 0
    %437 = vmatprep.subr.bf16.mxu0 0
    %438 = vmatpush1.bf16.msra.mxu0 0
    %439 = vmatprep.subr.bf16.mxu0 0
    %440 = vmatpush1.bf16.msra.mxu0 0
    %441 = vmatprep.subr.bf16.mxu0 0
    %442 = vmatpush1.bf16.msra.mxu0 0
    %443 = vmatprep.subr.bf16.mxu0 0
    %444 = vmatpush1.bf16.msra.mxu0 0
    %445 = vmatprep.subr.bf16.mxu0 0
    %446 = vmatpush1.bf16.msra.mxu0 0
    %447 = vmatprep.subr.bf16.mxu0 0
    %448 = vmatpush1.bf16.msra.mxu0 0
    %449 = vmatprep.subr.bf16.mxu0 0
    %450 = vmatpush1.bf16.msra.mxu0 0
    %451 = vmatprep.subr.bf16.mxu0 0
    %452 = vmatpush1.bf16.msra.mxu0 0
    %453 = vmatprep.mubr.bf16.mxu0 0
    %454 = vmatmul.mubr.bf16.gmra.mrb[0].mxu0 %v419
    %v455 = vpop.f32.mrb[0].mxu0
    %v456 = vadd.f32 0.0, %v455
    %v457 = vpop.f32.mrb[0].mxu0
    %v458 = vpop.f32.mrb[0].mxu0
    %v459 = vadd.f32 0.0, %v458
    %v460 = vpop.f32.mrb[0].mxu0
    %461 = vdwg.mxu0
    %464 = vrot.lane.b32.xlu0 %v456, 8
    %v465 = vpop.permute.xlu0 %464
    %466 = vrot.lane.b32.xlu0 %v459, 8
    %v467 = vpop.permute.xlu0 %466
    %vm470 = vcmask 130112
    %471 = vst.msk [vmem:[#allocation2] sm:$0xff] %vm470, %v465
    %472 = vst.msk [vmem:[#allocation2 + $0x8] sm:$0xff] %vm470, %v467
    %473 = vrot.lane.b32.xlu0 %v216, 112
    %v474 = vpop.permute.xlu0 %473
    %475 = vrot.lane.b32.xlu0 %v216, 80
    %v476 = vpop.permute.xlu0 %475
    %v478 = vsel %vm220, %v474, 0
    %v481 = vsel %vm220, %v476, 0
    %483 = vmatprep.subr.bf16.mxu0 0
    %484 = vmatpush1.bf16.xpose.msra.mxu0 %v481
    %485 = vmatprep.subr.bf16.mxu0 0
    %486 = vmatpush1.bf16.xpose.msra.mxu0 0
    %487 = vmatprep.subr.bf16.mxu0 0
    %488 = vmatpush1.bf16.xpose.msra.mxu0 0
    %489 = vmatprep.subr.bf16.mxu0 0
    %490 = vmatpush1.bf16.xpose.msra.mxu0 0
    %491 = vmatprep.subr.bf16.mxu0 0
    %492 = vmatpush1.bf16.xpose.msra.mxu0 0
    %493 = vmatprep.subr.bf16.mxu0 0
    %494 = vmatpush1.bf16.xpose.msra.mxu0 0
    %495 = vmatprep.subr.bf16.mxu0 0
    %496 = vmatpush1.bf16.xpose.msra.mxu0 0
    %497 = vmatprep.subr.bf16.mxu0 0
    %498 = vmatpush1.bf16.xpose.msra.mxu0 0
    %499 = vmatprep.subr.bf16.mxu0 0
    %500 = vmatpush1.bf16.xpose.msra.mxu0 0
    %501 = vmatprep.subr.bf16.mxu0 0
    %502 = vmatpush1.bf16.xpose.msra.mxu0 0
    %503 = vmatprep.subr.bf16.mxu0 0
    %504 = vmatpush1.bf16.xpose.msra.mxu0 0
    %505 = vmatprep.subr.bf16.mxu0 0
    %506 = vmatpush1.bf16.xpose.msra.mxu0 0
    %507 = vmatprep.subr.bf16.mxu0 0
    %508 = vmatpush1.bf16.xpose.msra.mxu0 0
    %509 = vmatprep.subr.bf16.mxu0 0
    %510 = vmatpush1.bf16.xpose.msra.mxu0 0
    %511 = vmatprep.subr.bf16.mxu0 0
    %512 = vmatpush1.bf16.xpose.msra.mxu0 0
    %513 = vmatprep.subr.bf16.mxu0 0
    %514 = vmatpush1.bf16.xpose.msra.mxu0 0
    %515 = vmatprep.mubr.bf16.mxu0 0
    %516 = vmatmul.mubr.bf16.gmra.mrb[0].mxu0 %v478
    %v517 = vpop.f32.mrb[0].mxu0
    %v518 = vadd.f32 %v214, %v517
    %v519 = vpop.f32.mrb[0].mxu0
    %v520 = vpop.f32.mrb[0].mxu0
    %v521 = vadd.f32 %v215, %v520
    %v522 = vpop.f32.mrb[0].mxu0
    %523 = vdwg.mxu0
    %v524 = vsel %vm268, %v518, -inf
    %525 = vmax.xlane.f32.xlu0 %v524
    %v526 = vpop.xlane.xlu0 %525
    %v527 = vsel %vm268, %v521, -inf
    %528 = vmax.xlane.f32.xlu0 %v527
    %v529 = vpop.xlane.xlu0 %528
    %v530 = vsub.f32 %v518, %v526
    %v531 = vsub.f32 %v521, %v529
    %v532 = vmul.f32 %v530, 1.442695
    %v533 = vpow.pop %v532
    %v534 = vmul.f32 %v531, 1.442695
    %v535 = vpow.pop %v534
    %v536 = vsel %vm268, %v533, 0.0
    %537 = vadd.xlane.f32.xlu0 %v536
    %v538 = vpop.xlane.xlu0 %537
    %v539 = vsel %vm268, %v535, 0.0
    %540 = vadd.xlane.f32.xlu0 %v539
    %v541 = vpop.xlane.xlu0 %540
    %v542 = vrcp.pop %v538
    %v543 = vmul.f32 %v533, %v542
    %v544 = vrcp.pop %v541
    %v545 = vmul.f32 %v535, %v544
    %v546 = vpack.c.bf16 %v545, %v543
    %547 = vrot.lane.b32.xlu0 %v216, 48
    %v548 = vpop.permute.xlu0 %547
    %v551 = vsel %vm268, %v546, 0
    %553 = vmatprep.subr.bf16.mxu0 0
    %554 = vmatpush1.bf16.msra.mxu0 %v548
    %555 = vmatprep.subr.bf16.mxu0 0
    %556 = vmatpush1.bf16.msra.mxu0 0
    %557 = vmatprep.subr.bf16.mxu0 0
    %558 = vmatpush1.bf16.msra.mxu0 0
    %559 = vmatprep.subr.bf16.mxu0 0
    %560 = vmatpush1.bf16.msra.mxu0 0
    %561 = vmatprep.subr.bf16.mxu0 0
    %562 = vmatpush1.bf16.msra.mxu0 0
    %563 = vmatprep.subr.bf16.mxu0 0
    %564 = vmatpush1.bf16.msra.mxu0 0
    %565 = vmatprep.subr.bf16.mxu0 0
    %566 = vmatpush1.bf16.msra.mxu0 0
    %567 = vmatprep.subr.bf16.mxu0 0
    %568 = vmatpush1.bf16.msra.mxu0 0
    %569 = vmatprep.subr.bf16.mxu0 0
    %570 = vmatpush1.bf16.msra.mxu0 0
    %571 = vmatprep.subr.bf16.mxu0 0
    %572 = vmatpush1.bf16.msra.mxu0 0
    %573 = vmatprep.subr.bf16.mxu0 0
    %574 = vmatpush1.bf16.msra.mxu0 0
    %575 = vmatprep.subr.bf16.mxu0 0
    %576 = vmatpush1.bf16.msra.mxu0 0
    %577 = vmatprep.subr.bf16.mxu0 0
    %578 = vmatpush1.bf16.msra.mxu0 0
    %579 = vmatprep.subr.bf16.mxu0 0
    %580 = vmatpush1.bf16.msra.mxu0 0
    %581 = vmatprep.subr.bf16.mxu0 0
    %582 = vmatpush1.bf16.msra.mxu0 0
    %583 = vmatprep.subr.bf16.mxu0 0
    %584 = vmatpush1.bf16.msra.mxu0 0
    %585 = vmatprep.mubr.bf16.mxu0 0
    %586 = vmatmul.mubr.bf16.gmra.mrb[0].mxu0 %v551
    %v587 = vpop.f32.mrb[0].mxu0
    %v588 = vadd.f32 0.0, %v587
    %v589 = vpop.f32.mrb[0].mxu0
    %v590 = vpop.f32.mrb[0].mxu0
    %v591 = vadd.f32 0.0, %v590
    %v592 = vpop.f32.mrb[0].mxu0
    %593 = vdwg.mxu0
    %596 = vrot.lane.b32.xlu0 %v588, 16
    %v597 = vpop.permute.xlu0 %596
    %598 = vrot.lane.b32.xlu0 %v591, 16
    %v599 = vpop.permute.xlu0 %598
    %vm602 = vcmask 195712
    %603 = vst.msk [vmem:[#allocation2] sm:$0xff] %vm602, %v597
    %604 = vst.msk [vmem:[#allocation2 + $0x8] sm:$0xff] %vm602, %v599
    %605 = vrot.lane.b32.xlu0 %v216, 104
    %v606 = vpop.permute.xlu0 %605
    %607 = vrot.lane.b32.xlu0 %v216, 72
    %v608 = vpop.permute.xlu0 %607
    %v610 = vsel %vm220, %v606, 0
    %v613 = vsel %vm220, %v608, 0
    %615 = vmatprep.subr.bf16.mxu0 0
    %616 = vmatpush1.bf16.xpose.msra.mxu0 %v613
    %617 = vmatprep.subr.bf16.mxu0 0
    %618 = vmatpush1.bf16.xpose.msra.mxu0 0
    %619 = vmatprep.subr.bf16.mxu0 0
    %620 = vmatpush1.bf16.xpose.msra.mxu0 0
    %621 = vmatprep.subr.bf16.mxu0 0
    %622 = vmatpush1.bf16.xpose.msra.mxu0 0
    %623 = vmatprep.subr.bf16.mxu0 0
    %624 = vmatpush1.bf16.xpose.msra.mxu0 0
    %625 = vmatprep.subr.bf16.mxu0 0
    %626 = vmatpush1.bf16.xpose.msra.mxu0 0
    %627 = vmatprep.subr.bf16.mxu0 0
    %628 = vmatpush1.bf16.xpose.msra.mxu0 0
    %629 = vmatprep.subr.bf16.mxu0 0
    %630 = vmatpush1.bf16.xpose.msra.mxu0 0
    %631 = vmatprep.subr.bf16.mxu0 0
    %632 = vmatpush1.bf16.xpose.msra.mxu0 0
    %633 = vmatprep.subr.bf16.mxu0 0
    %634 = vmatpush1.bf16.xpose.msra.mxu0 0
    %635 = vmatprep.subr.bf16.mxu0 0
    %636 = vmatpush1.bf16.xpose.msra.mxu0 0
    %637 = vmatprep.subr.bf16.mxu0 0
    %638 = vmatpush1.bf16.xpose.msra.mxu0 0
    %639 = vmatprep.subr.bf16.mxu0 0
    %640 = vmatpush1.bf16.xpose.msra.mxu0 0
    %641 = vmatprep.subr.bf16.mxu0 0
    %642 = vmatpush1.bf16.xpose.msra.mxu0 0
    %643 = vmatprep.subr.bf16.mxu0 0
    %644 = vmatpush1.bf16.xpose.msra.mxu0 0
    %645 = vmatprep.subr.bf16.mxu0 0
    %646 = vmatpush1.bf16.xpose.msra.mxu0 0
    %647 = vmatprep.mubr.bf16.mxu0 0
    %648 = vmatmul.mubr.bf16.gmra.mrb[0].mxu0 %v610
    %v649 = vpop.f32.mrb[0].mxu0
    %v650 = vadd.f32 %v214, %v649
    %v651 = vpop.f32.mrb[0].mxu0
    %v652 = vpop.f32.mrb[0].mxu0
    %v653 = vadd.f32 %v215, %v652
    %v654 = vpop.f32.mrb[0].mxu0
    %655 = vdwg.mxu0
    %v656 = vsel %vm268, %v650, -inf
    %657 = vmax.xlane.f32.xlu0 %v656
    %v658 = vpop.xlane.xlu0 %657
    %v659 = vsel %vm268, %v653, -inf
    %660 = vmax.xlane.f32.xlu0 %v659
    %v661 = vpop.xlane.xlu0 %660
    %v662 = vsub.f32 %v650, %v658
    %v663 = vsub.f32 %v653, %v661
    %v664 = vmul.f32 %v662, 1.442695
    %v665 = vpow.pop %v664
    %v666 = vmul.f32 %v663, 1.442695
    %v667 = vpow.pop %v666
    %v668 = vsel %vm268, %v665, 0.0
    %669 = vadd.xlane.f32.xlu0 %v668
    %v670 = vpop.xlane.xlu0 %669
    %v671 = vsel %vm268, %v667, 0.0
    %672 = vadd.xlane.f32.xlu0 %v671
    %v673 = vpop.xlane.xlu0 %672
    %v674 = vrcp.pop %v670
    %v675 = vmul.f32 %v665, %v674
    %v676 = vrcp.pop %v673
    %v677 = vmul.f32 %v667, %v676
    %v678 = vpack.c.bf16 %v677, %v675
    %679 = vrot.lane.b32.xlu0 %v216, 40
    %v680 = vpop.permute.xlu0 %679
    %v683 = vsel %vm268, %v678, 0
    %685 = vmatprep.subr.bf16.mxu0 0
    %686 = vmatpush1.bf16.msra.mxu0 %v680
    %687 = vmatprep.subr.bf16.mxu0 0
    %688 = vmatpush1.bf16.msra.mxu0 0
    %689 = vmatprep.subr.bf16.mxu0 0
    %690 = vmatpush1.bf16.msra.mxu0 0
    %691 = vmatprep.subr.bf16.mxu0 0
    %692 = vmatpush1.bf16.msra.mxu0 0
    %693 = vmatprep.subr.bf16.mxu0 0
    %694 = vmatpush1.bf16.msra.mxu0 0
    %695 = vmatprep.subr.bf16.mxu0 0
    %696 = vmatpush1.bf16.msra.mxu0 0
    %697 = vmatprep.subr.bf16.mxu0 0
    %698 = vmatpush1.bf16.msra.mxu0 0
    %699 = vmatprep.subr.bf16.mxu0 0
    %700 = vmatpush1.bf16.msra.mxu0 0
    %701 = vmatprep.subr.bf16.mxu0 0
    %702 = vmatpush1.bf16.msra.mxu0 0
    %703 = vmatprep.subr.bf16.mxu0 0
    %704 = vmatpush1.bf16.msra.mxu0 0
    %705 = vmatprep.subr.bf16.mxu0 0
    %706 = vmatpush1.bf16.msra.mxu0 0
    %707 = vmatprep.subr.bf16.mxu0 0
    %708 = vmatpush1.bf16.msra.mxu0 0
    %709 = vmatprep.subr.bf16.mxu0 0
    %710 = vmatpush1.bf16.msra.mxu0 0
    %711 = vmatprep.subr.bf16.mxu0 0
    %712 = vmatpush1.bf16.msra.mxu0 0
    %713 = vmatprep.subr.bf16.mxu0 0
    %714 = vmatpush1.bf16.msra.mxu0 0
    %715 = vmatprep.subr.bf16.mxu0 0
    %716 = vmatpush1.bf16.msra.mxu0 0
    %717 = vmatprep.mubr.bf16.mxu0 0
    %718 = vmatmul.mubr.bf16.gmra.mrb[0].mxu0 %v683
    %v719 = vpop.f32.mrb[0].mxu0
    %v720 = vadd.f32 0.0, %v719
    %v721 = vpop.f32.mrb[0].mxu0
    %v722 = vpop.f32.mrb[0].mxu0
    %v723 = vadd.f32 0.0, %v722
    %v724 = vpop.f32.mrb[0].mxu0
    %725 = vdwg.mxu0
    %728 = vrot.lane.b32.xlu0 %v720, 24
    %v729 = vpop.permute.xlu0 %728
    %730 = vrot.lane.b32.xlu0 %v723, 24
    %v731 = vpop.permute.xlu0 %730
    %vm734 = vcmask 261312
    %735 = vst.msk [vmem:[#allocation2] sm:$0xff] %vm734, %v729
    %736 = vst.msk [vmem:[#allocation2 + $0x8] sm:$0xff] %vm734, %v731
    %v737 = vld [vmem:[#allocation2] sm:$0xff]
    %v738 = vld [vmem:[#allocation2 + $0x8] sm:$0xff]
    %v739 = vpack.c.bf16 %v738, %v737
    %v740 = vld [vmem:[%s4] sm:$0xf]
    %v741 = vld [vmem:[%s4 + $0x4] sm:$0xf]
    %v742 = vld [vmem:[%s4 + $0x8] sm:$0xf]
    %v743 = vld [vmem:[%s4 + $0xc] sm:$0xf]
    %v744 = vlaneseq
    %v745 = vshrl.u32 %v744, 7
    %v746 = vsub.s32 2, %v745
    %v747 = vrot.slane %v102, %v746
    %v752 = vunpack.c.l.b16 %v740
    %v753 = vunpack.c.l.b16 %v741
    %v754 = vunpack.c.l.b16 %v742
    %v755 = vunpack.c.l.b16 %v743
    %v756 = vpack.c.b16 %v753, %v752
    %v757 = vpack.c.b16 %v755, %v754
    %v761 = vsel %vm106, %v739, 0
    %763 = vmatprep.subr.bf16.mxu0 0
    %764 = vmatpush1.bf16.msra.mxu0 %v756
    %765 = vmatprep.subr.bf16.mxu0 0
    %766 = vmatpush1.bf16.msra.mxu0 %v757
    %767 = vmatprep.subr.bf16.mxu0 0
    %768 = vmatpush1.bf16.msra.mxu0 0
    %769 = vmatprep.subr.bf16.mxu0 0
    %770 = vmatpush1.bf16.msra.mxu0 0
    %771 = vmatprep.subr.bf16.mxu0 0
    %772 = vmatpush1.bf16.msra.mxu0 0
    %773 = vmatprep.subr.bf16.mxu0 0
    %774 = vmatpush1.bf16.msra.mxu0 0
    %775 = vmatprep.subr.bf16.mxu0 0
    %776 = vmatpush1.bf16.msra.mxu0 0
    %777 = vmatprep.subr.bf16.mxu0 0
    %778 = vmatpush1.bf16.msra.mxu0 0
    %779 = vmatprep.subr.bf16.mxu0 0
    %780 = vmatpush1.bf16.msra.mxu0 0
    %781 = vmatprep.subr.bf16.mxu0 0
    %782 = vmatpush1.bf16.msra.mxu0 0
    %783 = vmatprep.subr.bf16.mxu0 0
    %784 = vmatpush1.bf16.msra.mxu0 0
    %785 = vmatprep.subr.bf16.mxu0 0
    %786 = vmatpush1.bf16.msra.mxu0 0
    %787 = vmatprep.subr.bf16.mxu0 0
    %788 = vmatpush1.bf16.msra.mxu0 0
    %789 = vmatprep.subr.bf16.mxu0 0
    %790 = vmatpush1.bf16.msra.mxu0 0
    %791 = vmatprep.subr.bf16.mxu0 0
    %792 = vmatpush1.bf16.msra.mxu0 0
    %793 = vmatprep.subr.bf16.mxu0 0
    %794 = vmatpush1.bf16.msra.mxu0 0
    %795 = vmatprep.mubr.bf16.mxu0 0
    %796 = vmatmul.mubr.bf16.gmra.mrb[0].mxu0 %v761
    %v797 = vpop.f32.mrb[0].mxu0
    %v798 = vadd.f32 %v747, %v797
    %v799 = vpop.f32.mrb[0].mxu0
    %v800 = vpop.f32.mrb[0].mxu0
    %v801 = vadd.f32 %v747, %v800
    %v802 = vpop.f32.mrb[0].mxu0
    %803 = vdwg.mxu0
    %v804 = vadd.f32 %v144, %v798
    %v805 = vadd.f32 %v145, %v801
    %v806 = vsel %vm106, %v804, 0.0
    %807 = vadd.xlane.f32.xlu0 %v806
    %v808 = vpop.xlane.xlu0 %807
    %v809 = vsel %vm106, %v805, 0.0
    %810 = vadd.xlane.f32.xlu0 %v809
    %v811 = vpop.xlane.xlu0 %810
    %v812 = vmul.f32 %v808, %v113
    %v813 = vmul.f32 %v811, %v113
    %v814 = vsub.f32 %v804, %v812
    %v815 = vsub.f32 %v805, %v813
    %v816 = vmul.f32 %v814, %v814
    %v817 = vmul.f32 %v815, %v815
    %v818 = vsel %vm106, %v816, 0.0
    %819 = vadd.xlane.f32.xlu0 %v818
    %v820 = vpop.xlane.xlu0 %819
    %v821 = vsel %vm106, %v817, 0.0
    %822 = vadd.xlane.f32.xlu0 %v821
    %v823 = vpop.xlane.xlu0 %822
    %v824 = vmul.f32 %v820, %v113
    %v825 = vmul.f32 %v823, %v113
    %v826 = vadd.f32 %v824, 1e-12
    %v827 = vadd.f32 %v825, 1e-12
    %v828 = vrsqrt.pop %v826
    %v829 = vrsqrt.pop %v827
    %v830 = vmul.f32 %v814, %v828
    %v831 = vmul.f32 %v815, %v829
    %v832 = vlaneseq
    %v833 = vshrl.u32 %v832, 7
    %v834 = vsub.s32 3, %v833
    %v835 = vrot.slane %v102, %v834
    %v836 = vmul.f32 %v830, %v835
    %v837 = vmul.f32 %v831, %v835
    %v838 = vlaneseq
    %v839 = vshrl.u32 %v838, 7
    %v840 = vsub.s32 4, %v839
    %v841 = vrot.slane %v102, %v840
    %v842 = vadd.f32 %v836, %v841
    %v843 = vadd.f32 %v837, %v841
    %v844 = vpack.c.bf16 %v843, %v842
    %v845 = vld [vmem:[#allocation4] sm:$0xf]
    %v846 = vld [vmem:[#allocation4 + $0x4] sm:$0xf]
    %v847 = vld [vmem:[#allocation4 + $0x8] sm:$0xf]
    %v848 = vld [vmem:[#allocation4 + $0xc] sm:$0xf]
    %v849 = vld [vmem:[%s6] sm:$0x1]
    %v851 = vlaneseq
    %v852 = vshrl.u32 %v851, 7
    %v853 = vsub.s32 0, %v852
    %v854 = vrot.slane %v849, %v853
    %v860 = vunpack.c.l.b16 %v845
    %v861 = vunpack.c.l.b16 %v846
    %v862 = vunpack.c.l.b16 %v847
    %v863 = vunpack.c.l.b16 %v848
    %v864 = vpack.c.b16 %v861, %v860
    %v865 = vpack.c.b16 %v863, %v862
    %v869 = vsel %vm106, %v844, 0
    %871 = vmatprep.subr.bf16.mxu0 0
    %872 = vmatpush1.bf16.msra.mxu0 %v864
    %873 = vmatprep.subr.bf16.mxu0 0
    %874 = vmatpush1.bf16.msra.mxu0 %v865
    %875 = vmatprep.subr.bf16.mxu0 0
    %876 = vmatpush1.bf16.msra.mxu0 0
    %877 = vmatprep.subr.bf16.mxu0 0
    %878 = vmatpush1.bf16.msra.mxu0 0
    %879 = vmatprep.subr.bf16.mxu0 0
    %880 = vmatpush1.bf16.msra.mxu0 0
    %881 = vmatprep.subr.bf16.mxu0 0
    %882 = vmatpush1.bf16.msra.mxu0 0
    %883 = vmatprep.subr.bf16.mxu0 0
    %884 = vmatpush1.bf16.msra.mxu0 0
    %885 = vmatprep.subr.bf16.mxu0 0
    %886 = vmatpush1.bf16.msra.mxu0 0
    %887 = vmatprep.subr.bf16.mxu0 0
    %888 = vmatpush1.bf16.msra.mxu0 0
    %889 = vmatprep.subr.bf16.mxu0 0
    %890 = vmatpush1.bf16.msra.mxu0 0
    %891 = vmatprep.subr.bf16.mxu0 0
    %892 = vmatpush1.bf16.msra.mxu0 0
    %893 = vmatprep.subr.bf16.mxu0 0
    %894 = vmatpush1.bf16.msra.mxu0 0
    %895 = vmatprep.subr.bf16.mxu0 0
    %896 = vmatpush1.bf16.msra.mxu0 0
    %897 = vmatprep.subr.bf16.mxu0 0
    %898 = vmatpush1.bf16.msra.mxu0 0
    %899 = vmatprep.subr.bf16.mxu0 0
    %900 = vmatpush1.bf16.msra.mxu0 0
    %901 = vmatprep.subr.bf16.mxu0 0
    %902 = vmatpush1.bf16.msra.mxu0 0
    %903 = vmatprep.mubr.bf16.mxu0 0
    %904 = vmatmul.mubr.bf16.gmra.mrb[0].mxu0 %v869
    %v905 = vpop.f32.mrb[0].mxu0
    %v906 = vadd.f32 %v854, %v905
    %v907 = vpop.f32.mrb[0].mxu0
    %v908 = vpop.f32.mrb[0].mxu0
    %v909 = vadd.f32 %v854, %v908
    %v910 = vpop.f32.mrb[0].mxu0
    %911 = vdwg.mxu0
    %v912 = vmul.f32 %v906, %v906
    %v913 = vmul.f32 %v909, %v909
    %v914 = vmul.f32 %v906, %v912
    %v915 = vmul.f32 %v909, %v913
    %v916 = vmul.f32 %v914, 0.044715
    %v917 = vmul.f32 %v915, 0.044715
    %v918 = vadd.f32 %v906, %v916
    %v919 = vadd.f32 %v909, %v917
    %v920 = vmul.f32 %v918, 0.7978846
    %v921 = vmul.f32 %v919, 0.7978846
    %v922 = vtanh.pop %v920
    %v923 = vtanh.pop %v921
    %v924 = vadd.f32 %v922, 1.0
    %v925 = vadd.f32 %v923, 1.0
    %v926 = vmul.f32 %v924, 0.5
    %v927 = vmul.f32 %v925, 0.5
    %v928 = vmul.f32 %v906, %v926
    %v929 = vmul.f32 %v909, %v927
    %v930 = vpack.c.bf16 %v929, %v928
    %v931 = vld [vmem:[%s7] sm:$0xf]
    %v932 = vld [vmem:[%s7 + $0x4] sm:$0xf]
    %v933 = vld [vmem:[%s7 + $0x8] sm:$0xf]
    %v934 = vld [vmem:[%s7 + $0xc] sm:$0xf]
    %v935 = vld [vmem:[%s7 + $0x10] sm:$0xf]
    %v936 = vld [vmem:[%s7 + $0x14] sm:$0xf]
    %v937 = vld [vmem:[%s7 + $0x18] sm:$0xf]
    %v938 = vld [vmem:[%s7 + $0x1c] sm:$0xf]
    %v939 = vlaneseq
    %v940 = vshrl.u32 %v939, 7
    %v941 = vsub.s32 5, %v940
    %v942 = vrot.slane %v102, %v941
    %v951 = vunpack.c.l.b16 %v931
    %v952 = vunpack.c.l.b16 %v932
    %v953 = vunpack.c.l.b16 %v933
    %v954 = vunpack.c.l.b16 %v934
    %v955 = vunpack.c.l.b16 %v935
    %v956 = vunpack.c.l.b16 %v936
    %v957 = vunpack.c.l.b16 %v937
    %v958 = vunpack.c.l.b16 %v938
    %v959 = vpack.c.b16 %v952, %v951
    %v960 = vpack.c.b16 %v954, %v953
    %v961 = vpack.c.b16 %v956, %v955
    %v962 = vpack.c.b16 %v958, %v957
    %vm967 = vcmask 523264
    %v969 = vsel %vm967, %v930, 0
    %971 = vmatprep.subr.bf16.mxu0 0
    %972 = vmatpush1.bf16.msra.mxu0 %v959
    %973 = vmatprep.subr.bf16.mxu0 0
    %974 = vmatpush1.bf16.msra.mxu0 %v960
    %975 = vmatprep.subr.bf16.mxu0 0
    %976 = vmatpush1.bf16.msra.mxu0 %v961
    %977 = vmatprep.subr.bf16.mxu0 0
    %978 = vmatpush1.bf16.msra.mxu0 %v962
    %979 = vmatprep.subr.bf16.mxu0 0
    %980 = vmatpush1.bf16.msra.mxu0 0
    %981 = vmatprep.subr.bf16.mxu0 0
    %982 = vmatpush1.bf16.msra.mxu0 0
    %983 = vmatprep.subr.bf16.mxu0 0
    %984 = vmatpush1.bf16.msra.mxu0 0
    %985 = vmatprep.subr.bf16.mxu0 0
    %986 = vmatpush1.bf16.msra.mxu0 0
    %987 = vmatprep.subr.bf16.mxu0 0
    %988 = vmatpush1.bf16.msra.mxu0 0
    %989 = vmatprep.subr.bf16.mxu0 0
    %990 = vmatpush1.bf16.msra.mxu0 0
    %991 = vmatprep.subr.bf16.mxu0 0
    %992 = vmatpush1.bf16.msra.mxu0 0
    %993 = vmatprep.subr.bf16.mxu0 0
    %994 = vmatpush1.bf16.msra.mxu0 0
    %995 = vmatprep.subr.bf16.mxu0 0
    %996 = vmatpush1.bf16.msra.mxu0 0
    %997 = vmatprep.subr.bf16.mxu0 0
    %998 = vmatpush1.bf16.msra.mxu0 0
    %999 = vmatprep.subr.bf16.mxu0 0
    %1000 = vmatpush1.bf16.msra.mxu0 0
    %1001 = vmatprep.subr.bf16.mxu0 0
    %1002 = vmatpush1.bf16.msra.mxu0 0
    %1003 = vmatprep.mubr.bf16.mxu0 0
    %1004 = vmatmul.mubr.bf16.gmra.mrb[0].mxu0 %v969
    %v1005 = vpop.f32.mrb[0].mxu0
    %v1006 = vadd.f32 %v942, %v1005
    %v1007 = vpop.f32.mrb[0].mxu0
    %v1008 = vpop.f32.mrb[0].mxu0
    %v1009 = vadd.f32 %v942, %v1008
    %v1010 = vpop.f32.mrb[0].mxu0
    %1011 = vdwg.mxu0
    %v1012 = vadd.f32 %v842, %v1006
    %v1013 = vadd.f32 %v843, %v1009
    %v1014 = vsel %vm106, %v1012, 0.0
    %1015 = vadd.xlane.f32.xlu0 %v1014
    %v1016 = vpop.xlane.xlu0 %1015
    %v1017 = vsel %vm106, %v1013, 0.0
    %1018 = vadd.xlane.f32.xlu0 %v1017
    %v1019 = vpop.xlane.xlu0 %1018
    %v1020 = vmul.f32 %v1016, %v113
    %v1021 = vmul.f32 %v1019, %v113
    %v1022 = vsub.f32 %v1012, %v1020
    %v1023 = vsub.f32 %v1013, %v1021
    %v1024 = vmul.f32 %v1022, %v1022
    %v1025 = vmul.f32 %v1023, %v1023
    %v1026 = vsel %vm106, %v1024, 0.0
    %1027 = vadd.xlane.f32.xlu0 %v1026
    %v1028 = vpop.xlane.xlu0 %1027
    %v1029 = vsel %vm106, %v1025, 0.0
    %1030 = vadd.xlane.f32.xlu0 %v1029
    %v1031 = vpop.xlane.xlu0 %1030
    %v1032 = vmul.f32 %v1028, %v113
    %v1033 = vmul.f32 %v1031, %v113
    %v1034 = vadd.f32 %v1032, 1e-12
    %v1035 = vadd.f32 %v1033, 1e-12
    %v1036 = vrsqrt.pop %v1034
    %v1037 = vrsqrt.pop %v1035
    %v1038 = vmul.f32 %v1022, %v1036
    %v1039 = vmul.f32 %v1023, %v1037
    %v1040 = vlaneseq
    %v1041 = vshrl.u32 %v1040, 7
    %v1042 = vsub.s32 6, %v1041
    %v1043 = vrot.slane %v102, %v1042
    %v1044 = vmul.f32 %v1038, %v1043
    %v1045 = vmul.f32 %v1039, %v1043
    %v1046 = vlaneseq
    %v1047 = vshrl.u32 %v1046, 7
    %v1048 = vsub.s32 7, %v1047
    %v1049 = vrot.slane %v102, %v1048
    %v1050 = vadd.f32 %v1044, %v1049
    %v1051 = vadd.f32 %v1045, %v1049
    %s1052 = sld [smem:[#allocation3]]
    %v1053 = vlaneseq
    %v1054 = vand.u32 %v1053, 127
    %v1055 = vlaneseq
    %v1056 = vshrl.u32 %v1055, 7
    %v1057 = vmul.u32 %v1056, 8
    %v1058 = vstv %s1052
    %v1059 = vadd.s32 %v1057, %v1058
    %vm1060 = vcmp.eq.s32.totalorder %v1054, %v1059
    %v1061 = vsel %vm1060, 1.0, 0.0
    %v1062 = vpack.c.bf16 %v1061, %v1061
    %v1063 = vpack.c.bf16 %v1051, %v1050
    %v1065 = vsel %vm268, %v1062, 0
    %1067 = vmatprep.subr.bf16.mxu0 0
    %1068 = vmatpush1.bf16.msra.mxu0 %v1063
    %1069 = vmatprep.subr.bf16.mxu0 0
    %1070 = vmatpush1.bf16.msra.mxu0 0
    %1071 = vmatprep.subr.bf16.mxu0 0
    %1072 = vmatpush1.bf16.msra.mxu0 0
    %1073 = vmatprep.subr.bf16.mxu0 0
    %1074 = vmatpush1.bf16.msra.mxu0 0
    %1075 = vmatprep.subr.bf16.mxu0 0
    %1076 = vmatpush1.bf16.msra.mxu0 0
    %1077 = vmatprep.subr.bf16.mxu0 0
    %1078 = vmatpush1.bf16.msra.mxu0 0
    %1079 = vmatprep.subr.bf16.mxu0 0
    %1080 = vmatpush1.bf16.msra.mxu0 0
    %1081 = vmatprep.subr.bf16.mxu0 0
    %1082 = vmatpush1.bf16.msra.mxu0 0
    %1083 = vmatprep.subr.bf16.mxu0 0
    %1084 = vmatpush1.bf16.msra.mxu0 0
    %1085 = vmatprep.subr.bf16.mxu0 0
    %1086 = vmatpush1.bf16.msra.mxu0 0
    %1087 = vmatprep.subr.bf16.mxu0 0
    %1088 = vmatpush1.bf16.msra.mxu0 0
    %1089 = vmatprep.subr.bf16.mxu0 0
    %1090 = vmatpush1.bf16.msra.mxu0 0
    %1091 = vmatprep.subr.bf16.mxu0 0
    %1092 = vmatpush1.bf16.msra.mxu0 0
    %1093 = vmatprep.subr.bf16.mxu0 0
    %1094 = vmatpush1.bf16.msra.mxu0 0
    %1095 = vmatprep.subr.bf16.mxu0 0
    %1096 = vmatpush1.bf16.msra.mxu0 0
    %1097 = vmatprep.subr.bf16.mxu0 0
    %1098 = vmatpush1.bf16.msra.mxu0 0
    %1099 = vmatprep.mubr.bf16.mxu0 0
    %1100 = vmatmul.mubr.bf16.gmra.mrb[0].mxu0 %v1065
    %v1101 = vpop.f32.mrb[0].mxu0
    %v1102 = vadd.f32 0.0, %v1101
    %v1103 = vpop.f32.mrb[0].mxu0
    %v1104 = vpop.f32.mrb[0].mxu0
    %v1105 = vpop.f32.mrb[0].mxu0
    %1106 = vdwg.mxu0
    %v1107 = vpack.c.bf16 %v1102, %v1102
    %v1108 = vld [vmem:[#allocation7] sm:$0xf]
    %v1109 = vld [vmem:[#allocation7 + $0x4] sm:$0xf]
    %v1110 = vld [vmem:[#allocation7 + $0x8] sm:$0xf]
    %v1111 = vld [vmem:[#allocation7 + $0xc] sm:$0xf]
    %v1112 = vlaneseq
    %v1113 = vshrl.u32 %v1112, 7
    %v1114 = vsub.s32 0, %v1113
    %v1115 = vrot.slane %v103, %v1114
    %v1120 = vunpack.c.l.b16 %v1108
    %v1121 = vunpack.c.l.b16 %v1109
    %v1122 = vunpack.c.l.b16 %v1110
    %v1123 = vunpack.c.l.b16 %v1111
    %v1124 = vpack.c.b16 %v1121, %v1120
    %v1125 = vpack.c.b16 %v1123, %v1122
    %v1129 = vsel %vm106, %v1107, 0
    %1131 = vmatprep.subr.bf16.mxu0 0
    %1132 = vmatpush1.bf16.msra.mxu0 %v1124
    %1133 = vmatprep.subr.bf16.mxu0 0
    %1134 = vmatpush1.bf16.msra.mxu0 %v1125
    %1135 = vmatprep.subr.bf16.mxu0 0
    %1136 = vmatpush1.bf16.msra.mxu0 0
    %1137 = vmatprep.subr.bf16.mxu0 0
    %1138 = vmatpush1.bf16.msra.mxu0 0
    %1139 = vmatprep.subr.bf16.mxu0 0
    %1140 = vmatpush1.bf16.msra.mxu0 0
    %1141 = vmatprep.subr.bf16.mxu0 0
    %1142 = vmatpush1.bf16.msra.mxu0 0
    %1143 = vmatprep.subr.bf16.mxu0 0
    %1144 = vmatpush1.bf16.msra.mxu0 0
    %1145 = vmatprep.subr.bf16.mxu0 0
    %1146 = vmatpush1.bf16.msra.mxu0 0
    %1147 = vmatprep.subr.bf16.mxu0 0
    %1148 = vmatpush1.bf16.msra.mxu0 0
    %1149 = vmatprep.subr.bf16.mxu0 0
    %1150 = vmatpush1.bf16.msra.mxu0 0
    %1151 = vmatprep.subr.bf16.mxu0 0
    %1152 = vmatpush1.bf16.msra.mxu0 0
    %1153 = vmatprep.subr.bf16.mxu0 0
    %1154 = vmatpush1.bf16.msra.mxu0 0
    %1155 = vmatprep.subr.bf16.mxu0 0
    %1156 = vmatpush1.bf16.msra.mxu0 0
    %1157 = vmatprep.subr.bf16.mxu0 0
    %1158 = vmatpush1.bf16.msra.mxu0 0
    %1159 = vmatprep.subr.bf16.mxu0 0
    %1160 = vmatpush1.bf16.msra.mxu0 0
    %1161 = vmatprep.subr.bf16.mxu0 0
    %1162 = vmatpush1.bf16.msra.mxu0 0
    %1163 = vmatprep.mubr.bf16.mxu0 0
    %1164 = vmatmul.mubr.bf16.gmra.mrb[0].mxu0 %v1129
    %v1165 = vpop.f32.mrb[0].mxu0
    %v1166 = vadd.f32 %v1115, %v1165
    %v1167 = vpop.f32.mrb[0].mxu0
    %v1168 = vpop.f32.mrb[0].mxu0
    %v1169 = vpop.f32.mrb[0].mxu0
    %1170 = vdwg.mxu0
    %v1171 = vmul.f32 %v1166, %v1166
    %v1172 = vmul.f32 %v1166, %v1171
    %v1173 = vmul.f32 %v1172, 0.044715
    %v1174 = vadd.f32 %v1166, %v1173
    %v1175 = vmul.f32 %v1174, 0.7978846
    %v1176 = vtanh.pop %v1175
    %v1177 = vadd.f32 %v1176, 1.0
    %v1178 = vmul.f32 %v1177, 0.5
    %v1179 = vmul.f32 %v1166, %v1178
    %vm1180 = vcmask 254976
    %v1181 = vsel %vm1180, %v1179, 0.0
    %1182 = vadd.xlane.f32.xlu0 %v1181
    %v1183 = vpop.xlane.xlu0 %1182
    %v1184 = vmul.f32 %v1183, %v113
    %v1185 = vsub.f32 %v1179, %v1184
    %v1186 = vmul.f32 %v1185, %v1185
    %v1187 = vsel %vm1180, %v1186, 0.0
    %1188 = vadd.xlane.f32.xlu0 %v1187
    %v1189 = vpop.xlane.xlu0 %1188
    %v1190 = vmul.f32 %v1189, %v113
    %v1191 = vadd.f32 %v1190, 1e-12
    %v1192 = vrsqrt.pop %v1191
    %v1193 = vmul.f32 %v1185, %v1192
    %v1194 = vlaneseq
    %v1195 = vshrl.u32 %v1194, 7
    %v1196 = vsub.s32 1, %v1195
    %v1197 = vrot.slane %v103, %v1196
    %v1198 = vmul.f32 %v1193, %v1197
    %v1199 = vlaneseq
    %v1200 = vshrl.u32 %v1199, 7
    %v1201 = vsub.s32 2, %v1200
    %v1202 = vrot.slane %v103, %v1201
    %v1203 = vadd.f32 %v1198, %v1202
    %v1204 = vpack.c.bf16 %v1203, %v1203
    %v1205 = vld [vmem:[%s9] sm:$0xf]
    %v1206 = vld [vmem:[%s9 + $0x4] sm:$0xf]
    %v1207 = vld [vmem:[%s9 + $0x8] sm:$0xf]
    %v1208 = vld [vmem:[%s9 + $0xc] sm:$0xf]
    %v1209 = vld [vmem:[%s10] sm:$0x1]
    %v1211 = vlaneseq
    %v1212 = vshrl.u32 %v1211, 7
    %v1213 = vsub.s32 0, %v1212
    %v1214 = vrot.slane %v1209, %v1213
    %v1220 = vunpack.c.l.b16 %v1205
    %v1221 = vunpack.c.l.b16 %v1206
    %v1222 = vunpack.c.l.b16 %v1207
    %v1223 = vunpack.c.l.b16 %v1208
    %v1224 = vpack.c.b16 %v1221, %v1220
    %v1225 = vpack.c.b16 %v1223, %v1222
    %v1229 = vsel %vm106, %v1204, 0
    %1231 = vmatprep.subr.bf16.mxu0 0
    %1232 = vmatpush1.bf16.msra.mxu0 %v1224
    %1233 = vmatprep.subr.bf16.mxu0 0
    %1234 = vmatpush1.bf16.msra.mxu0 %v1225
    %1235 = vmatprep.subr.bf16.mxu0 0
    %1236 = vmatpush1.bf16.msra.mxu0 0
    %1237 = vmatprep.subr.bf16.mxu0 0
    %1238 = vmatpush1.bf16.msra.mxu0 0
    %1239 = vmatprep.subr.bf16.mxu0 0
    %1240 = vmatpush1.bf16.msra.mxu0 0
    %1241 = vmatprep.subr.bf16.mxu0 0
    %1242 = vmatpush1.bf16.msra.mxu0 0
    %1243 = vmatprep.subr.bf16.mxu0 0
    %1244 = vmatpush1.bf16.msra.mxu0 0
    %1245 = vmatprep.subr.bf16.mxu0 0
    %1246 = vmatpush1.bf16.msra.mxu0 0
    %1247 = vmatprep.subr.bf16.mxu0 0
    %1248 = vmatpush1.bf16.msra.mxu0 0
    %1249 = vmatprep.subr.bf16.mxu0 0
    %1250 = vmatpush1.bf16.msra.mxu0 0
    %1251 = vmatprep.subr.bf16.mxu0 0
    %1252 = vmatpush1.bf16.msra.mxu0 0
    %1253 = vmatprep.subr.bf16.mxu0 0
    %1254 = vmatpush1.bf16.msra.mxu0 0
    %1255 = vmatprep.subr.bf16.mxu0 0
    %1256 = vmatpush1.bf16.msra.mxu0 0
    %1257 = vmatprep.subr.bf16.mxu0 0
    %1258 = vmatpush1.bf16.msra.mxu0 0
    %1259 = vmatprep.subr.bf16.mxu0 0
    %1260 = vmatpush1.bf16.msra.mxu0 0
    %1261 = vmatprep.subr.bf16.mxu0 0
    %1262 = vmatpush1.bf16.msra.mxu0 0
    %1263 = vmatprep.mubr.bf16.mxu0 0
    %1264 = vmatmul.mubr.bf16.gmra.mrb[0].mxu0 %v1229
    %v1265 = vpop.f32.mrb[0].mxu0
    %v1266 = vadd.f32 %v1214, %v1265
    %v1267 = vpop.f32.mrb[0].mxu0
    %v1268 = vpop.f32.mrb[0].mxu0
    %v1269 = vpop.f32.mrb[0].mxu0
    %1270 = vdwg.mxu0
    %vm1271 = vcmask 1041408
    %v1272 = vsel %vm1271, %v1266, -inf
    %1273 = vmax.xlane.f32.xlu0 %v1272
    %v1274 = vpop.xlane.xlu0 %1273
    %v1275 = vsub.f32 %v1266, %v1274
    %v1276 = vmul.f32 %v1275, 1.442695
    %v1277 = vpow.pop %v1276
    %v1278 = vsel %vm1271, %v1277, 0.0
    %1279 = vadd.xlane.f32.xlu0 %v1278
    %v1280 = vpop.xlane.xlu0 %1279
    %v1281 = vrcp.pop %v1280
    %v1282 = vmul.f32 %v1277, %v1281
    %1283 = vst [vmem:[#allocation12] sm:$0x3] %v1282
    // Predicated region
    $region70: #{tpu_custom_call.1} parent=1 // pred_check
      _
    $region71: #{tpu_custom_call.1} parent=1 // pred_check_branch
      %1285 = sbr.rel (0) target = $region73
    $region72: #{tpu_custom_call.1} parent=1 // pred_region
      %s1287 = ssub.s32 32, 32
      %1288 = vsyncadd [#allocation6], %s1287
      %s1290 = sshll.u32 [#allocation12], 4
      %s1291 = int_to_ptr.vmem [resolvable:$true] %s1290
      %1293 = dma.vmem_to_hbm [thread:$0]  %s1291, 32, %s13, [#allocation6]
    $region73: #{tpu_custom_call.1} parent=1 // pred_fallthru
      _
    // Predicated region
    $region74: #{tpu_custom_call.1} parent=1 // pred_check
      _
    $region75: #{tpu_custom_call.1} parent=1 // pred_check_branch
      %1295 = sbr.rel (0) target = $region77
    $region76: #{tpu_custom_call.1} parent=1 // pred_region
      %1296 = dma.done [#allocation6], 32
    $region77: #{tpu_custom_call.1} parent=1 // pred_fallthru
      _
    %1297 = vsyncpa [#allocation5], 1
    %1298 = vsyncpa [#allocation8], 1
    %1299 = vsyncpa [#allocation11], 1
    %1300 = vsyncpa [#allocation6], 1

</llo_original>
